<compile_context>
chip_gen: v5e
topology: v5e:2x2
jax: 0.10.0
libtpu: 0.0.40
codegen_flags: <defaults>
</compile_context>

<pallas_src>
import functools

import jax
import jax.numpy as jnp
from jax.experimental import pallas as pl
from jax.experimental.pallas import tpu as pltpu

BN_EPS = 1e-5
LANES = 128
SUBLANES = 8
# Fused-kernel VMEM footprint here is <1 MiB; a 32 MiB scoped limit is safe on
# v5e/v6e (128 MiB physical VMEM) and v7x (64 MiB physical VMEM).
VMEM_LIMIT_BYTES = 32 * 1024 * 1024


def _round_up(x, m):
    return (x + m - 1) // m * m


def conv_bn_relu_kernel(x_ref, w_ref, gamma_ref, beta_ref, o_ref, *,
                        n, h, w_out, cin_p, cout_p, activation):
    """Fused 3x3 conv (merged-tap single matmul) + train-mode BN + ReLU.

    x_ref:     (N, H+2, W+2, Cin_p)  bf16   padded NHWC input (whole array)
    w_ref:     (9*Cin_p, Cout_p)     bf16   3x3 taps merged into K
    gamma_ref: (1, Cout_p)           f32
    beta_ref:  (1, Cout_p)           f32
    o_ref:     (N, H, W, Cout_p)     f32    lane-dense NHWC output
    """
    x = x_ref[...]
    # VMEM-only patch gather: nine shifted halo views concatenated along the
    # lane (channel) axis -> one MXU matmul with K = 9*Cin_p instead of nine
    # K = Cin_p matmuls. No im2col in HBM, no per-tap accumulate chains.
    patches = jnp.concatenate(
        [x[:, dh:dh + h, dw:dw + w_out, :]
         for dh in range(3) for dw in range(3)],
        axis=-1)                                            # (N, H, W, 9*Cin_p)
    m = n * h * w_out
    y = jnp.dot(patches.reshape(m, 9 * cin_p), w_ref[...],
                preferred_element_type=jnp.float32)         # (M, Cout_p) f32

    # Training-mode BatchNorm over the N*H*W axis, per channel. Centered
    # second moment (not E[y^2] - E[y]^2) to avoid catastrophic cancellation.
    inv_count = 1.0 / m
    mean = jnp.sum(y, axis=0, keepdims=True) * inv_count    # (1, Cout_p)
    centered = y - mean
    var = jnp.sum(centered * centered, axis=0, keepdims=True) * inv_count
    scale = gamma_ref[...] * jax.lax.rsqrt(var + BN_EPS)    # EUP rsqrt
    out = centered * scale + beta_ref[...]                  # one FMA / element
    if activation:
        out = jnp.maximum(out, 0.0)
    o_ref[...] = out.reshape(n, h, w_out, cout_p).astype(o_ref.dtype)


def conv_block_forward(x, w, b, gamma, beta, activation=True):
    """x: (N, Cin, H, W) NCHW; w: (Cout, Cin, 3, 3); b/gamma/beta: (Cout,)."""
    del b  # conv bias cancels exactly under training-mode BatchNorm
    n, cin, h, wd = x.shape
    cout = w.shape[0]
    cin_p = _round_up(cin, SUBLANES)
    cout_p = _round_up(cout, LANES)

    # NCHW -> NHWC, spatial halo pad (1), channel pad; bf16 matmul operands.
    # TODO(synk): keep NHWC as the network-native layout across layers to drop
    #             this per-layer transpose; NCHW kept to match the module API.
    x_nhwc = jnp.transpose(x, (0, 2, 3, 1))
    x_pad = jnp.pad(x_nhwc, ((0, 0), (1, 1), (1, 1), (0, cin_p - cin)))
    x_pad = x_pad.astype(jnp.bfloat16)                      # (N, H+2, W+2, Cin_p)

    # (Cout, Cin, 3, 3) -> (dh, dw, Cin_p, Cout_p) -> merged-K (9*Cin_p, Cout_p)
    # so that K index = dh*3*Cin_p + dw*Cin_p + cin matches the patch gather.
    w_t = jnp.transpose(w, (2, 3, 1, 0))                    # (3, 3, Cin, Cout)
    w_t = jnp.pad(w_t, ((0, 0), (0, 0), (0, cin_p - cin), (0, cout_p - cout)))
    w_merged = w_t.reshape(9 * cin_p, cout_p).astype(jnp.bfloat16)

    gamma_row = jnp.pad(gamma.astype(jnp.float32),
                        (0, cout_p - cout)).reshape(1, cout_p)
    beta_row = jnp.pad(beta.astype(jnp.float32),
                       (0, cout_p - cout)).reshape(1, cout_p)

    # Whole problem fits VMEM, so run one fused grid-less kernel: one DMA in,
    # one matmul, in-kernel BN statistics + fold, one lane-dense store.
    # TODO(synk): for shapes whose conv output exceeds VMEM, switch to a
    #             multi-row-tile grid (ROWS+2 halo blocks) with a stored bf16
    #             conv output and a pure elementwise normalize pass.
    kernel = functools.partial(
        conv_bn_relu_kernel, n=n, h=h, w_out=wd, cin_p=cin_p, cout_p=cout_p,
        activation=activation)
    vmem_spec = pl.BlockSpec(memory_space=pltpu.MemorySpace.VMEM)
    out_nhwc = pl.pallas_call(
        kernel,
        out_shape=jax.ShapeDtypeStruct((n, h, wd, cout_p), jnp.float32),
        in_specs=[vmem_spec, vmem_spec, vmem_spec, vmem_spec],
        out_specs=vmem_spec,
        compiler_params=pltpu.CompilerParams(vmem_limit_bytes=VMEM_LIMIT_BYTES),
    )(x_pad, w_merged, gamma_row, beta_row)

    # Slice real channels, back to the module's NCHW interface.
    out = out_nhwc[..., :cout]
    return jnp.transpose(out, (0, 3, 1, 2))


def conv_block_reference(x, w, b, gamma, beta, activation=True):
    """Pure-JAX reference matching PyTorch Conv2d + BatchNorm2d(train) + ReLU."""
    y = jax.lax.conv_general_dilated(
        x.astype(jnp.float32), w.astype(jnp.float32),
        window_strides=(1, 1), padding=((1, 1), (1, 1)),
        dimension_numbers=("NCHW", "OIHW", "NCHW"))
    y = y + b[None, :, None, None]
    mean = y.mean(axis=(0, 2, 3), keepdims=True)
    var = y.var(axis=(0, 2, 3), keepdims=True)  # biased, as BN forward uses
    out = gamma[None, :, None, None] * (y - mean) / jnp.sqrt(var + BN_EPS) \
        + beta[None, :, None, None]
    if activation:
        out = jnp.maximum(out, 0.0)
    return out


if __name__ == "__main__":
    key = jax.random.PRNGKey(0)
    k_x, k_w, k_b = jax.random.split(key, 3)

    N, Cin, H, W = 2, 4, 16, 16
    Cout = 8

    x = jax.random.normal(k_x, (N, Cin, H, W), dtype=jnp.float32)
    # Deterministic synthetic parameters (shapes per nn.Conv2d / nn.BatchNorm2d)
    w = jax.random.normal(k_w, (Cout, Cin, 3, 3), dtype=jnp.float32) * 0.1
    b = jax.random.normal(k_b, (Cout,), dtype=jnp.float32) * 0.1
    gamma = jnp.ones((Cout,), dtype=jnp.float32)   # BatchNorm weight init
    beta = jnp.zeros((Cout,), dtype=jnp.float32)   # BatchNorm bias init

    out = conv_block_forward(x, w, b, gamma, beta, activation=True)
    out = jax.block_until_ready(out)

    ref = conv_block_reference(x, w, b, gamma, beta, activation=True)
    assert out.shape == (N, Cout, H, W)
    # bf16 matmul operands (per perf guidance) -> tolerance sized for bf16;
    # a real bug produces O(1) errors, far above this.
    max_err = float(jnp.max(jnp.abs(out - ref)))
    assert jnp.allclose(out, ref, atol=3e-2, rtol=3e-2), f"max err {max_err}"

    print("KERNEL_OK")
</pallas_src>

<mosaic_0001>
module attributes {stable_mosaic.version = 11 : i64} {
  func.func @conv_bn_relu_kernel(%arg0: memref<2x18x18x8xbf16, #tpu.memory_space<vmem>>, %arg1: memref<72x128xbf16, #tpu.memory_space<vmem>>, %arg2: memref<1x128xf32, #tpu.memory_space<vmem>>, %arg3: memref<1x128xf32, #tpu.memory_space<vmem>>, %arg4: memref<2x16x16x128xf32, #tpu.memory_space<vmem>>) attributes {dimension_semantics = [], scalar_prefetch = 0 : i64, scratch_operands = 0 : i64, tpu.core_type = #tpu.core_type<tc>} {
    %c0 = arith.constant 0 : index
    %c0_0 = arith.constant 0 : index
    %c0_1 = arith.constant 0 : index
    %c0_2 = arith.constant 0 : index
    %0 = vector.load %arg0[%c0, %c0_0, %c0_1, %c0_2] : memref<2x18x18x8xbf16, #tpu.memory_space<vmem>>, vector<2x18x18x8xbf16>
    %1 = vector.extract_strided_slice %0 {offsets = [0, 0, 0, 0], sizes = [2, 16, 16, 8], strides = [1, 1, 1, 1]} : vector<2x18x18x8xbf16> to vector<2x16x16x8xbf16>
    %2 = vector.extract_strided_slice %0 {offsets = [0, 0, 1, 0], sizes = [2, 16, 16, 8], strides = [1, 1, 1, 1]} : vector<2x18x18x8xbf16> to vector<2x16x16x8xbf16>
    %3 = vector.extract_strided_slice %0 {offsets = [0, 0, 2, 0], sizes = [2, 16, 16, 8], strides = [1, 1, 1, 1]} : vector<2x18x18x8xbf16> to vector<2x16x16x8xbf16>
    %4 = vector.extract_strided_slice %0 {offsets = [0, 1, 0, 0], sizes = [2, 16, 16, 8], strides = [1, 1, 1, 1]} : vector<2x18x18x8xbf16> to vector<2x16x16x8xbf16>
    %5 = vector.extract_strided_slice %0 {offsets = [0, 1, 1, 0], sizes = [2, 16, 16, 8], strides = [1, 1, 1, 1]} : vector<2x18x18x8xbf16> to vector<2x16x16x8xbf16>
    %6 = vector.extract_strided_slice %0 {offsets = [0, 1, 2, 0], sizes = [2, 16, 16, 8], strides = [1, 1, 1, 1]} : vector<2x18x18x8xbf16> to vector<2x16x16x8xbf16>
    %7 = vector.extract_strided_slice %0 {offsets = [0, 2, 0, 0], sizes = [2, 16, 16, 8], strides = [1, 1, 1, 1]} : vector<2x18x18x8xbf16> to vector<2x16x16x8xbf16>
    %8 = vector.extract_strided_slice %0 {offsets = [0, 2, 1, 0], sizes = [2, 16, 16, 8], strides = [1, 1, 1, 1]} : vector<2x18x18x8xbf16> to vector<2x16x16x8xbf16>
    %9 = vector.extract_strided_slice %0 {offsets = [0, 2, 2, 0], sizes = [2, 16, 16, 8], strides = [1, 1, 1, 1]} : vector<2x18x18x8xbf16> to vector<2x16x16x8xbf16>
    %10 = tpu.concatenate %1, %2, %3, %4, %5, %6, %7, %8, %9 in 3 : vector<2x16x16x8xbf16>, vector<2x16x16x8xbf16>, vector<2x16x16x8xbf16>, vector<2x16x16x8xbf16>, vector<2x16x16x8xbf16>, vector<2x16x16x8xbf16>, vector<2x16x16x8xbf16>, vector<2x16x16x8xbf16>, vector<2x16x16x8xbf16> -> vector<2x16x16x72xbf16>
    %11 = vector.shape_cast %10 : vector<2x16x16x72xbf16> to vector<512x72xbf16>
    %c0_3 = arith.constant 0 : index
    %c0_4 = arith.constant 0 : index
    %12 = vector.load %arg1[%c0_3, %c0_4] : memref<72x128xbf16, #tpu.memory_space<vmem>>, vector<72x128xbf16>
    %cst = arith.constant dense<0.000000e+00> : vector<512x128xf32>
    %13 = tpu.matmul %11, %12, %cst {dimension_numbers = #tpu.dot_dimension_numbers<[1], [0], [0], [1], [0, 0, 1, 1], [], []>} : vector<512x72xbf16>, vector<72x128xbf16>, vector<512x128xf32> -> vector<512x128xf32>
    %cst_5 = arith.constant dense<0.000000e+00> : vector<128xf32>
    %14 = vector.multi_reduction <add>, %13, %cst_5 [0] : vector<512x128xf32> to vector<128xf32>
    %15 = vector.shape_cast %14 : vector<128xf32> to vector<1x128xf32>
    %cst_6 = arith.constant 0.001953125 : f32
    %16 = vector.broadcast %cst_6 : f32 to vector<1x128xf32>
    %17 = arith.mulf %15, %16 : vector<1x128xf32>
    %18 = vector.broadcast %17 : vector<1x128xf32> to vector<512x128xf32>
    %19 = arith.subf %13, %18 : vector<512x128xf32>
    %20 = arith.mulf %19, %19 : vector<512x128xf32>
    %cst_7 = arith.constant dense<0.000000e+00> : vector<128xf32>
    %21 = vector.multi_reduction <add>, %20, %cst_7 [0] : vector<512x128xf32> to vector<128xf32>
    %22 = vector.shape_cast %21 : vector<128xf32> to vector<1x128xf32>
    %cst_8 = arith.constant 0.001953125 : f32
    %23 = vector.broadcast %cst_8 : f32 to vector<1x128xf32>
    %24 = arith.mulf %22, %23 : vector<1x128xf32>
    %c0_9 = arith.constant 0 : index
    %c0_10 = arith.constant 0 : index
    %25 = vector.load %arg2[%c0_9, %c0_10] : memref<1x128xf32, #tpu.memory_space<vmem>>, vector<1x128xf32>
    %cst_11 = arith.constant 9.99999974E-6 : f32
    %26 = vector.broadcast %cst_11 : f32 to vector<1x128xf32>
    %27 = arith.addf %24, %26 : vector<1x128xf32>
    %28 = math.rsqrt %27 : vector<1x128xf32>
    %29 = arith.mulf %25, %28 : vector<1x128xf32>
    %30 = vector.broadcast %29 : vector<1x128xf32> to vector<512x128xf32>
    %31 = arith.mulf %19, %30 : vector<512x128xf32>
    %c0_12 = arith.constant 0 : index
    %c0_13 = arith.constant 0 : index
    %32 = vector.load %arg3[%c0_12, %c0_13] : memref<1x128xf32, #tpu.memory_space<vmem>>, vector<1x128xf32>
    %33 = vector.broadcast %32 : vector<1x128xf32> to vector<512x128xf32>
    %34 = arith.addf %31, %33 : vector<512x128xf32>
    %cst_14 = arith.constant 0.000000e+00 : f32
    %35 = vector.broadcast %cst_14 : f32 to vector<512x128xf32>
    %36 = arith.maximumf %34, %35 : vector<512x128xf32>
    %37 = vector.shape_cast %36 : vector<512x128xf32> to vector<2x16x16x128xf32>
    %c0_15 = arith.constant 0 : index
    %c0_16 = arith.constant 0 : index
    %c0_17 = arith.constant 0 : index
    %c0_18 = arith.constant 0 : index
    %38 = vector.load %arg4[%c0_15, %c0_16, %c0_17, %c0_18] : memref<2x16x16x128xf32, #tpu.memory_space<vmem>>, vector<2x16x16x128xf32>
    tpu.vector_store %arg4[%c0_15, %c0_16, %c0_17, %c0_18], %37 {strides = array<i32>} : memref<2x16x16x128xf32, #tpu.memory_space<vmem>>, vector<2x16x16x128xf32>,
    return
  }
}

</mosaic_0001>

<llo_original>
// kernel: tpu_custom_call.1
$region0: #{tpu_custom_call.1}
  #allocation0 [shape = 'u32[]', space=smem, size = 0x4, offset = 0x4, fixed_abs, tag = 'smem constant byte address 0x4 - core index']
  #allocation1 [shape = 'u32[72,128]{1,0:T(1,128)}', space=vmem, size = 0x9000, scoped, tag = 'internal scratch']
  %s0 = inlined_call_operand.vmem [shape: bf16[2,18,18,8], index: 0, kind: input, shape index: {}]
  %s1 = inlined_call_operand.vmem [shape: bf16[72,128], index: 1, kind: input, shape index: {}]
  %s2 = inlined_call_operand.vmem [shape: f32[1,128], index: 2, kind: input, shape index: {}]
  %s3 = inlined_call_operand.vmem [shape: f32[1,128], index: 3, kind: input, shape index: {}]
  %s4 = inlined_call_operand.hbm [shape: f32[2,16,16,128], index: 4, kind: output, shape index: {}]
  %s5 = sld [smem:[#allocation0]]
  $region26: #{tpu_custom_call.1} parent=0
    _
  %s7 = ssub.s32 1, %s5
  %s8 = scalar_select 0, %s7, %s5
  $region1: #{tpu_custom_call.1} parent=0
    #allocation2 [shape = 'u8[262144]{0}', space=vmem, size = 0x40000, scoped, tag = 'output window, operand 0, single buffered']
    #allocation3 [shape = 's32[1]{0}', space=sflag, size = 0x4, scoped, tag = 'scoped memory for tpu_custom_call.1']
    %9 = vsyncpa [#allocation3], 0
    // Predicated region
    $region2: #{tpu_custom_call.1} parent=1 // pred_check
      _
    $region3: #{tpu_custom_call.1} parent=1 // pred_check_branch
      %11 = sbr.rel (0) target = $region5
    $region4: #{tpu_custom_call.1} parent=1 // pred_region
      _
    $region5: #{tpu_custom_call.1} parent=1 // pred_fallthru
      _
    // Predicated region
    $region6: #{tpu_custom_call.1} parent=1 // pred_check
      _
    $region7: #{tpu_custom_call.1} parent=1 // pred_check_branch
      %13 = sbr.rel (0) target = $region9
    $region8: #{tpu_custom_call.1} parent=1 // pred_region
      _
    $region9: #{tpu_custom_call.1} parent=1 // pred_fallthru
      _
    // Predicated region
    $region10: #{tpu_custom_call.1} parent=1 // pred_check
      _
    $region11: #{tpu_custom_call.1} parent=1 // pred_check_branch
      %15 = sbr.rel (0) target = $region13
    $region12: #{tpu_custom_call.1} parent=1 // pred_region
      _
    $region13: #{tpu_custom_call.1} parent=1 // pred_fallthru
      _
    // Predicated region
    $region14: #{tpu_custom_call.1} parent=1 // pred_check
      _
    $region15: #{tpu_custom_call.1} parent=1 // pred_check_branch
      %17 = sbr.rel (0) target = $region17
    $region16: #{tpu_custom_call.1} parent=1 // pred_region
      _
    $region17: #{tpu_custom_call.1} parent=1 // pred_fallthru
      _
    %v19 = vld [vmem:[%s0] sm:$0xf]
    %v20 = vld [vmem:[%s0 + $0x4] sm:$0xf]
    %v21 = vld [vmem:[%s0 + $0x8] sm:$0x1]
    %v22 = vld [vmem:[%s0 + $0xc] sm:$0xf]
    %v23 = vld [vmem:[%s0 + $0x10] sm:$0xf]
    %v24 = vld [vmem:[%s0 + $0x14] sm:$0x1]
    %v25 = vld [vmem:[%s0 + $0x18] sm:$0xf]
    %v26 = vld [vmem:[%s0 + $0x1c] sm:$0xf]
    %v27 = vld [vmem:[%s0 + $0x20] sm:$0x1]
    %v28 = vld [vmem:[%s0 + $0x24] sm:$0xf]
    %v29 = vld [vmem:[%s0 + $0x28] sm:$0xf]
    %v30 = vld [vmem:[%s0 + $0x2c] sm:$0x1]
    %v31 = vld [vmem:[%s0 + $0x30] sm:$0xf]
    %v32 = vld [vmem:[%s0 + $0x34] sm:$0xf]
    %v33 = vld [vmem:[%s0 + $0x38] sm:$0x1]
    %v34 = vld [vmem:[%s0 + $0x3c] sm:$0xf]
    %v35 = vld [vmem:[%s0 + $0x40] sm:$0xf]
    %v36 = vld [vmem:[%s0 + $0x44] sm:$0x1]
    %v37 = vld [vmem:[%s0 + $0x48] sm:$0xf]
    %v38 = vld [vmem:[%s0 + $0x4c] sm:$0xf]
    %v39 = vld [vmem:[%s0 + $0x50] sm:$0x1]
    %v40 = vld [vmem:[%s0 + $0x54] sm:$0xf]
    %v41 = vld [vmem:[%s0 + $0x58] sm:$0xf]
    %v42 = vld [vmem:[%s0 + $0x5c] sm:$0x1]
    %v43 = vld [vmem:[%s0 + $0x60] sm:$0xf]
    %v44 = vld [vmem:[%s0 + $0x64] sm:$0xf]
    %v45 = vld [vmem:[%s0 + $0x68] sm:$0x1]
    %v46 = vld [vmem:[%s0 + $0x6c] sm:$0xf]
    %v47 = vld [vmem:[%s0 + $0x70] sm:$0xf]
    %v48 = vld [vmem:[%s0 + $0x74] sm:$0x1]
    %v49 = vld [vmem:[%s0 + $0x78] sm:$0xf]
    %v50 = vld [vmem:[%s0 + $0x7c] sm:$0xf]
    %v51 = vld [vmem:[%s0 + $0x80] sm:$0x1]
    %v52 = vld [vmem:[%s0 + $0x84] sm:$0xf]
    %v53 = vld [vmem:[%s0 + $0x88] sm:$0xf]
    %v54 = vld [vmem:[%s0 + $0x8c] sm:$0x1]
    %v55 = vld [vmem:[%s0 + $0x90] sm:$0xf]
    %v56 = vld [vmem:[%s0 + $0x94] sm:$0xf]
    %v57 = vld [vmem:[%s0 + $0x98] sm:$0x1]
    %v58 = vld [vmem:[%s0 + $0x9c] sm:$0xf]
    %v59 = vld [vmem:[%s0 + $0xa0] sm:$0xf]
    %v60 = vld [vmem:[%s0 + $0xa4] sm:$0x1]
    %v61 = vld [vmem:[%s0 + $0xa8] sm:$0xf]
    %v62 = vld [vmem:[%s0 + $0xac] sm:$0xf]
    %v63 = vld [vmem:[%s0 + $0xb0] sm:$0x1]
    %v64 = vld [vmem:[%s0 + $0xb4] sm:$0xf]
    %v65 = vld [vmem:[%s0 + $0xb8] sm:$0xf]
    %v66 = vld [vmem:[%s0 + $0xbc] sm:$0x1]
    %v67 = vld [vmem:[%s0 + $0xc0] sm:$0xf]
    %v68 = vld [vmem:[%s0 + $0xc4] sm:$0xf]
    %v69 = vld [vmem:[%s0 + $0xc8] sm:$0x1]
    %v70 = vld [vmem:[%s0 + $0xcc] sm:$0xf]
    %v71 = vld [vmem:[%s0 + $0xd0] sm:$0xf]
    %v72 = vld [vmem:[%s0 + $0xd4] sm:$0x1]
    %v73 = vld [vmem:[%s0 + $0xd8] sm:$0xf]
    %v74 = vld [vmem:[%s0 + $0xdc] sm:$0xf]
    %v75 = vld [vmem:[%s0 + $0xe0] sm:$0x1]
    %v76 = vld [vmem:[%s0 + $0xe4] sm:$0xf]
    %v77 = vld [vmem:[%s0 + $0xe8] sm:$0xf]
    %v78 = vld [vmem:[%s0 + $0xec] sm:$0x1]
    %v79 = vld [vmem:[%s0 + $0xf0] sm:$0xf]
    %v80 = vld [vmem:[%s0 + $0xf4] sm:$0xf]
    %v81 = vld [vmem:[%s0 + $0xf8] sm:$0x1]
    %v82 = vld [vmem:[%s0 + $0xfc] sm:$0xf]
    %v83 = vld [vmem:[%s0 + $0x100] sm:$0xf]
    %v84 = vld [vmem:[%s0 + $0x104] sm:$0x1]
    %v85 = vld [vmem:[%s0 + $0x108] sm:$0xf]
    %v86 = vld [vmem:[%s0 + $0x10c] sm:$0xf]
    %v87 = vld [vmem:[%s0 + $0x110] sm:$0x1]
    %v88 = vld [vmem:[%s0 + $0x114] sm:$0xf]
    %v89 = vld [vmem:[%s0 + $0x118] sm:$0xf]
    %v90 = vld [vmem:[%s0 + $0x11c] sm:$0x1]
    %v91 = vld [vmem:[%s0 + $0x120] sm:$0xf]
    %v92 = vld [vmem:[%s0 + $0x124] sm:$0xf]
    %v93 = vld [vmem:[%s0 + $0x128] sm:$0x1]
    %v94 = vld [vmem:[%s0 + $0x12c] sm:$0xf]
    %v95 = vld [vmem:[%s0 + $0x130] sm:$0xf]
    %v96 = vld [vmem:[%s0 + $0x134] sm:$0x1]
    %v97 = vld [vmem:[%s0 + $0x138] sm:$0xf]
    %v98 = vld [vmem:[%s0 + $0x13c] sm:$0xf]
    %v99 = vld [vmem:[%s0 + $0x140] sm:$0x1]
    %v100 = vld [vmem:[%s0 + $0x144] sm:$0xf]
    %v101 = vld [vmem:[%s0 + $0x148] sm:$0xf]
    %v102 = vld [vmem:[%s0 + $0x14c] sm:$0x1]
    %v103 = vld [vmem:[%s0 + $0x150] sm:$0xf]
    %v104 = vld [vmem:[%s0 + $0x154] sm:$0xf]
    %v105 = vld [vmem:[%s0 + $0x158] sm:$0x1]
    %v106 = vld [vmem:[%s0 + $0x15c] sm:$0xf]
    %v107 = vld [vmem:[%s0 + $0x160] sm:$0xf]
    %v108 = vld [vmem:[%s0 + $0x164] sm:$0x1]
    %v109 = vld [vmem:[%s0 + $0x168] sm:$0xf]
    %v110 = vld [vmem:[%s0 + $0x16c] sm:$0xf]
    %v111 = vld [vmem:[%s0 + $0x170] sm:$0x1]
    %v112 = vld [vmem:[%s0 + $0x174] sm:$0xf]
    %v113 = vld [vmem:[%s0 + $0x178] sm:$0xf]
    %v114 = vld [vmem:[%s0 + $0x17c] sm:$0x1]
    %v115 = vld [vmem:[%s0 + $0x180] sm:$0xf]
    %v116 = vld [vmem:[%s0 + $0x184] sm:$0xf]
    %v117 = vld [vmem:[%s0 + $0x188] sm:$0x1]
    %v118 = vld [vmem:[%s0 + $0x18c] sm:$0xf]
    %v119 = vld [vmem:[%s0 + $0x190] sm:$0xf]
    %v120 = vld [vmem:[%s0 + $0x194] sm:$0x1]
    %v121 = vld [vmem:[%s0 + $0x198] sm:$0xf]
    %v122 = vld [vmem:[%s0 + $0x19c] sm:$0xf]
    %v123 = vld [vmem:[%s0 + $0x1a0] sm:$0x1]
    %v124 = vld [vmem:[%s0 + $0x1a4] sm:$0xf]
    %v125 = vld [vmem:[%s0 + $0x1a8] sm:$0xf]
    %v126 = vld [vmem:[%s0 + $0x1ac] sm:$0x1]
    %v191 = vunpack.c.l.b16 %v19
    %v192 = vunpack.c.l.b16 %v20
    %v193 = vunpack.c.l.b16 %v22
    %v194 = vunpack.c.l.b16 %v23
    %v195 = vunpack.c.l.b16 %v25
    %v196 = vunpack.c.l.b16 %v26
    %v197 = vunpack.c.l.b16 %v28
    %v198 = vunpack.c.l.b16 %v29
    %v199 = vunpack.c.l.b16 %v31
    %v200 = vunpack.c.l.b16 %v32
    %v201 = vunpack.c.l.b16 %v34
    %v202 = vunpack.c.l.b16 %v35
    %v203 = vunpack.c.l.b16 %v37
    %v204 = vunpack.c.l.b16 %v38
    %v205 = vunpack.c.l.b16 %v40
    %v206 = vunpack.c.l.b16 %v41
    %v207 = vunpack.c.l.b16 %v43
    %v208 = vunpack.c.l.b16 %v44
    %v209 = vunpack.c.l.b16 %v46
    %v210 = vunpack.c.l.b16 %v47
    %v211 = vunpack.c.l.b16 %v49
    %v212 = vunpack.c.l.b16 %v50
    %v213 = vunpack.c.l.b16 %v52
    %v214 = vunpack.c.l.b16 %v53
    %v215 = vunpack.c.l.b16 %v55
    %v216 = vunpack.c.l.b16 %v56
    %v217 = vunpack.c.l.b16 %v58
    %v218 = vunpack.c.l.b16 %v59
    %v219 = vunpack.c.l.b16 %v61
    %v220 = vunpack.c.l.b16 %v62
    %v221 = vunpack.c.l.b16 %v64
    %v222 = vunpack.c.l.b16 %v65
    %v223 = vunpack.c.l.b16 %v73
    %v224 = vunpack.c.l.b16 %v74
    %v225 = vunpack.c.l.b16 %v76
    %v226 = vunpack.c.l.b16 %v77
    %v227 = vunpack.c.l.b16 %v79
    %v228 = vunpack.c.l.b16 %v80
    %v229 = vunpack.c.l.b16 %v82
    %v230 = vunpack.c.l.b16 %v83
    %v231 = vunpack.c.l.b16 %v85
    %v232 = vunpack.c.l.b16 %v86
    %v233 = vunpack.c.l.b16 %v88
    %v234 = vunpack.c.l.b16 %v89
    %v235 = vunpack.c.l.b16 %v91
    %v236 = vunpack.c.l.b16 %v92
    %v237 = vunpack.c.l.b16 %v94
    %v238 = vunpack.c.l.b16 %v95
    %v239 = vunpack.c.l.b16 %v97
    %v240 = vunpack.c.l.b16 %v98
    %v241 = vunpack.c.l.b16 %v100
    %v242 = vunpack.c.l.b16 %v101
    %v243 = vunpack.c.l.b16 %v103
    %v244 = vunpack.c.l.b16 %v104
    %v245 = vunpack.c.l.b16 %v106
    %v246 = vunpack.c.l.b16 %v107
    %v247 = vunpack.c.l.b16 %v109
    %v248 = vunpack.c.l.b16 %v110
    %v249 = vunpack.c.l.b16 %v112
    %v250 = vunpack.c.l.b16 %v113
    %v251 = vunpack.c.l.b16 %v115
    %v252 = vunpack.c.l.b16 %v116
    %v253 = vunpack.c.l.b16 %v118
    %v254 = vunpack.c.l.b16 %v119
    %v255 = vpack.c.b16 %v192, %v191
    %v256 = vpack.c.b16 %v194, %v193
    %v257 = vpack.c.b16 %v196, %v195
    %v258 = vpack.c.b16 %v198, %v197
    %v259 = vpack.c.b16 %v200, %v199
    %v260 = vpack.c.b16 %v202, %v201
    %v261 = vpack.c.b16 %v204, %v203
    %v262 = vpack.c.b16 %v206, %v205
    %v263 = vpack.c.b16 %v208, %v207
    %v264 = vpack.c.b16 %v210, %v209
    %v265 = vpack.c.b16 %v212, %v211
    %v266 = vpack.c.b16 %v214, %v213
    %v267 = vpack.c.b16 %v216, %v215
    %v268 = vpack.c.b16 %v218, %v217
    %v269 = vpack.c.b16 %v220, %v219
    %v270 = vpack.c.b16 %v222, %v221
    %v271 = vpack.c.b16 %v224, %v223
    %v272 = vpack.c.b16 %v226, %v225
    %v273 = vpack.c.b16 %v228, %v227
    %v274 = vpack.c.b16 %v230, %v229
    %v275 = vpack.c.b16 %v232, %v231
    %v276 = vpack.c.b16 %v234, %v233
    %v277 = vpack.c.b16 %v236, %v235
    %v278 = vpack.c.b16 %v238, %v237
    %v279 = vpack.c.b16 %v240, %v239
    %v280 = vpack.c.b16 %v242, %v241
    %v281 = vpack.c.b16 %v244, %v243
    %v282 = vpack.c.b16 %v246, %v245
    %v283 = vpack.c.b16 %v248, %v247
    %v284 = vpack.c.b16 %v250, %v249
    %v285 = vpack.c.b16 %v252, %v251
    %v286 = vpack.c.b16 %v254, %v253
    %v319 = vunpack.c.l.b16 %v21
    %v320 = vunpack.c.l.b16 %v24
    %v321 = vunpack.c.l.b16 %v27
    %v322 = vunpack.c.l.b16 %v30
    %v323 = vunpack.c.l.b16 %v33
    %v324 = vunpack.c.l.b16 %v36
    %v325 = vunpack.c.l.b16 %v39
    %v326 = vunpack.c.l.b16 %v42
    %v327 = vunpack.c.l.b16 %v45
    %v328 = vunpack.c.l.b16 %v48
    %v329 = vunpack.c.l.b16 %v51
    %v330 = vunpack.c.l.b16 %v54
    %v331 = vunpack.c.l.b16 %v57
    %v332 = vunpack.c.l.b16 %v60
    %v333 = vunpack.c.l.b16 %v63
    %v334 = vunpack.c.l.b16 %v66
    %v335 = vunpack.c.l.b16 %v75
    %v336 = vunpack.c.l.b16 %v78
    %v337 = vunpack.c.l.b16 %v81
    %v338 = vunpack.c.l.b16 %v84
    %v339 = vunpack.c.l.b16 %v87
    %v340 = vunpack.c.l.b16 %v90
    %v341 = vunpack.c.l.b16 %v93
    %v342 = vunpack.c.l.b16 %v96
    %v343 = vunpack.c.l.b16 %v99
    %v344 = vunpack.c.l.b16 %v102
    %v345 = vunpack.c.l.b16 %v105
    %v346 = vunpack.c.l.b16 %v108
    %v347 = vunpack.c.l.b16 %v111
    %v348 = vunpack.c.l.b16 %v114
    %v349 = vunpack.c.l.b16 %v117
    %v350 = vunpack.c.l.b16 %v120
    %v351 = vpack.c.b16 %v319, %v319
    %v352 = vpack.c.b16 %v320, %v320
    %v353 = vpack.c.b16 %v321, %v321
    %v354 = vpack.c.b16 %v322, %v322
    %v355 = vpack.c.b16 %v323, %v323
    %v356 = vpack.c.b16 %v324, %v324
    %v357 = vpack.c.b16 %v325, %v325
    %v358 = vpack.c.b16 %v326, %v326
    %v359 = vpack.c.b16 %v327, %v327
    %v360 = vpack.c.b16 %v328, %v328
    %v361 = vpack.c.b16 %v329, %v329
    %v362 = vpack.c.b16 %v330, %v330
    %v363 = vpack.c.b16 %v331, %v331
    %v364 = vpack.c.b16 %v332, %v332
    %v365 = vpack.c.b16 %v333, %v333
    %v366 = vpack.c.b16 %v334, %v334
    %v367 = vpack.c.b16 %v335, %v335
    %v368 = vpack.c.b16 %v336, %v336
    %v369 = vpack.c.b16 %v337, %v337
    %v370 = vpack.c.b16 %v338, %v338
    %v371 = vpack.c.b16 %v339, %v339
    %v372 = vpack.c.b16 %v340, %v340
    %v373 = vpack.c.b16 %v341, %v341
    %v374 = vpack.c.b16 %v342, %v342
    %v375 = vpack.c.b16 %v343, %v343
    %v376 = vpack.c.b16 %v344, %v344
    %v377 = vpack.c.b16 %v345, %v345
    %v378 = vpack.c.b16 %v346, %v346
    %v379 = vpack.c.b16 %v347, %v347
    %v380 = vpack.c.b16 %v348, %v348
    %v381 = vpack.c.b16 %v349, %v349
    %v382 = vpack.c.b16 %v350, %v350
    %vm383 = vsmask.f32 7424
    %v385 = vshrl.u32 %v255, 16
    %v387 = vshll.u32 %v255, 16
    %v389 = vrot.slane %v387, 1
    %v390 = vor.u32 %v385, %v389
    %v392 = vshll.u32 %v351, 16
    %v394 = vrot.slane %v392, 1
    %v395 = vsel %vm383, %v390, %v394
    %v397 = vshrl.u32 %v256, 16
    %v399 = vshll.u32 %v256, 16
    %v401 = vrot.slane %v399, 1
    %v402 = vor.u32 %v397, %v401
    %v404 = vshll.u32 %v352, 16
    %v406 = vrot.slane %v404, 1
    %v407 = vsel %vm383, %v402, %v406
    %v409 = vshrl.u32 %v257, 16
    %v411 = vshll.u32 %v257, 16
    %v413 = vrot.slane %v411, 1
    %v414 = vor.u32 %v409, %v413
    %v416 = vshll.u32 %v353, 16
    %v418 = vrot.slane %v416, 1
    %v419 = vsel %vm383, %v414, %v418
    %v421 = vshrl.u32 %v258, 16
    %v423 = vshll.u32 %v258, 16
    %v425 = vrot.slane %v423, 1
    %v426 = vor.u32 %v421, %v425
    %v428 = vshll.u32 %v354, 16
    %v430 = vrot.slane %v428, 1
    %v431 = vsel %vm383, %v426, %v430
    %v433 = vshrl.u32 %v259, 16
    %v435 = vshll.u32 %v259, 16
    %v437 = vrot.slane %v435, 1
    %v438 = vor.u32 %v433, %v437
    %v440 = vshll.u32 %v355, 16
    %v442 = vrot.slane %v440, 1
    %v443 = vsel %vm383, %v438, %v442
    %v445 = vshrl.u32 %v260, 16
    %v447 = vshll.u32 %v260, 16
    %v449 = vrot.slane %v447, 1
    %v450 = vor.u32 %v445, %v449
    %v452 = vshll.u32 %v356, 16
    %v454 = vrot.slane %v452, 1
    %v455 = vsel %vm383, %v450, %v454
    %v457 = vshrl.u32 %v261, 16
    %v459 = vshll.u32 %v261, 16
    %v461 = vrot.slane %v459, 1
    %v462 = vor.u32 %v457, %v461
    %v464 = vshll.u32 %v357, 16
    %v466 = vrot.slane %v464, 1
    %v467 = vsel %vm383, %v462, %v466
    %v469 = vshrl.u32 %v262, 16
    %v471 = vshll.u32 %v262, 16
    %v473 = vrot.slane %v471, 1
    %v474 = vor.u32 %v469, %v473
    %v476 = vshll.u32 %v358, 16
    %v478 = vrot.slane %v476, 1
    %v479 = vsel %vm383, %v474, %v478
    %v481 = vshrl.u32 %v263, 16
    %v483 = vshll.u32 %v263, 16
    %v485 = vrot.slane %v483, 1
    %v486 = vor.u32 %v481, %v485
    %v488 = vshll.u32 %v359, 16
    %v490 = vrot.slane %v488, 1
    %v491 = vsel %vm383, %v486, %v490
    %v493 = vshrl.u32 %v264, 16
    %v495 = vshll.u32 %v264, 16
    %v497 = vrot.slane %v495, 1
    %v498 = vor.u32 %v493, %v497
    %v500 = vshll.u32 %v360, 16
    %v502 = vrot.slane %v500, 1
    %v503 = vsel %vm383, %v498, %v502
    %v505 = vshrl.u32 %v265, 16
    %v507 = vshll.u32 %v265, 16
    %v509 = vrot.slane %v507, 1
    %v510 = vor.u32 %v505, %v509
    %v512 = vshll.u32 %v361, 16
    %v514 = vrot.slane %v512, 1
    %v515 = vsel %vm383, %v510, %v514
    %v517 = vshrl.u32 %v266, 16
    %v519 = vshll.u32 %v266, 16
    %v521 = vrot.slane %v519, 1
    %v522 = vor.u32 %v517, %v521
    %v524 = vshll.u32 %v362, 16
    %v526 = vrot.slane %v524, 1
    %v527 = vsel %vm383, %v522, %v526
    %v529 = vshrl.u32 %v267, 16
    %v531 = vshll.u32 %v267, 16
    %v533 = vrot.slane %v531, 1
    %v534 = vor.u32 %v529, %v533
    %v536 = vshll.u32 %v363, 16
    %v538 = vrot.slane %v536, 1
    %v539 = vsel %vm383, %v534, %v538
    %v541 = vshrl.u32 %v268, 16
    %v543 = vshll.u32 %v268, 16
    %v545 = vrot.slane %v543, 1
    %v546 = vor.u32 %v541, %v545
    %v548 = vshll.u32 %v364, 16
    %v550 = vrot.slane %v548, 1
    %v551 = vsel %vm383, %v546, %v550
    %v553 = vshrl.u32 %v269, 16
    %v555 = vshll.u32 %v269, 16
    %v557 = vrot.slane %v555, 1
    %v558 = vor.u32 %v553, %v557
    %v560 = vshll.u32 %v365, 16
    %v562 = vrot.slane %v560, 1
    %v563 = vsel %vm383, %v558, %v562
    %v565 = vshrl.u32 %v270, 16
    %v567 = vshll.u32 %v270, 16
    %v569 = vrot.slane %v567, 1
    %v570 = vor.u32 %v565, %v569
    %v572 = vshll.u32 %v366, 16
    %v574 = vrot.slane %v572, 1
    %v575 = vsel %vm383, %v570, %v574
    %v577 = vshrl.u32 %v271, 16
    %v579 = vshll.u32 %v271, 16
    %v581 = vrot.slane %v579, 1
    %v582 = vor.u32 %v577, %v581
    %v584 = vshll.u32 %v367, 16
    %v586 = vrot.slane %v584, 1
    %v587 = vsel %vm383, %v582, %v586
    %v589 = vshrl.u32 %v272, 16
    %v591 = vshll.u32 %v272, 16
    %v593 = vrot.slane %v591, 1
    %v594 = vor.u32 %v589, %v593
    %v596 = vshll.u32 %v368, 16
    %v598 = vrot.slane %v596, 1
    %v599 = vsel %vm383, %v594, %v598
    %v601 = vshrl.u32 %v273, 16
    %v603 = vshll.u32 %v273, 16
    %v605 = vrot.slane %v603, 1
    %v606 = vor.u32 %v601, %v605
    %v608 = vshll.u32 %v369, 16
    %v610 = vrot.slane %v608, 1
    %v611 = vsel %vm383, %v606, %v610
    %v613 = vshrl.u32 %v274, 16
    %v615 = vshll.u32 %v274, 16
    %v617 = vrot.slane %v615, 1
    %v618 = vor.u32 %v613, %v617
    %v620 = vshll.u32 %v370, 16
    %v622 = vrot.slane %v620, 1
    %v623 = vsel %vm383, %v618, %v622
    %v625 = vshrl.u32 %v275, 16
    %v627 = vshll.u32 %v275, 16
    %v629 = vrot.slane %v627, 1
    %v630 = vor.u32 %v625, %v629
    %v632 = vshll.u32 %v371, 16
    %v634 = vrot.slane %v632, 1
    %v635 = vsel %vm383, %v630, %v634
    %v637 = vshrl.u32 %v276, 16
    %v639 = vshll.u32 %v276, 16
    %v641 = vrot.slane %v639, 1
    %v642 = vor.u32 %v637, %v641
    %v644 = vshll.u32 %v372, 16
    %v646 = vrot.slane %v644, 1
    %v647 = vsel %vm383, %v642, %v646
    %v649 = vshrl.u32 %v277, 16
    %v651 = vshll.u32 %v277, 16
    %v653 = vrot.slane %v651, 1
    %v654 = vor.u32 %v649, %v653
    %v656 = vshll.u32 %v373, 16
    %v658 = vrot.slane %v656, 1
    %v659 = vsel %vm383, %v654, %v658
    %v661 = vshrl.u32 %v278, 16
    %v663 = vshll.u32 %v278, 16
    %v665 = vrot.slane %v663, 1
    %v666 = vor.u32 %v661, %v665
    %v668 = vshll.u32 %v374, 16
    %v670 = vrot.slane %v668, 1
    %v671 = vsel %vm383, %v666, %v670
    %v673 = vshrl.u32 %v279, 16
    %v675 = vshll.u32 %v279, 16
    %v677 = vrot.slane %v675, 1
    %v678 = vor.u32 %v673, %v677
    %v680 = vshll.u32 %v375, 16
    %v682 = vrot.slane %v680, 1
    %v683 = vsel %vm383, %v678, %v682
    %v685 = vshrl.u32 %v280, 16
    %v687 = vshll.u32 %v280, 16
    %v689 = vrot.slane %v687, 1
    %v690 = vor.u32 %v685, %v689
    %v692 = vshll.u32 %v376, 16
    %v694 = vrot.slane %v692, 1
    %v695 = vsel %vm383, %v690, %v694
    %v697 = vshrl.u32 %v281, 16
    %v699 = vshll.u32 %v281, 16
    %v701 = vrot.slane %v699, 1
    %v702 = vor.u32 %v697, %v701
    %v704 = vshll.u32 %v377, 16
    %v706 = vrot.slane %v704, 1
    %v707 = vsel %vm383, %v702, %v706
    %v709 = vshrl.u32 %v282, 16
    %v711 = vshll.u32 %v282, 16
    %v713 = vrot.slane %v711, 1
    %v714 = vor.u32 %v709, %v713
    %v716 = vshll.u32 %v378, 16
    %v718 = vrot.slane %v716, 1
    %v719 = vsel %vm383, %v714, %v718
    %v721 = vshrl.u32 %v283, 16
    %v723 = vshll.u32 %v283, 16
    %v725 = vrot.slane %v723, 1
    %v726 = vor.u32 %v721, %v725
    %v728 = vshll.u32 %v379, 16
    %v730 = vrot.slane %v728, 1
    %v731 = vsel %vm383, %v726, %v730
    %v733 = vshrl.u32 %v284, 16
    %v735 = vshll.u32 %v284, 16
    %v737 = vrot.slane %v735, 1
    %v738 = vor.u32 %v733, %v737
    %v740 = vshll.u32 %v380, 16
    %v742 = vrot.slane %v740, 1
    %v743 = vsel %vm383, %v738, %v742
    %v745 = vshrl.u32 %v285, 16
    %v747 = vshll.u32 %v285, 16
    %v749 = vrot.slane %v747, 1
    %v750 = vor.u32 %v745, %v749
    %v752 = vshll.u32 %v381, 16
    %v754 = vrot.slane %v752, 1
    %v755 = vsel %vm383, %v750, %v754
    %v757 = vshrl.u32 %v286, 16
    %v759 = vshll.u32 %v286, 16
    %v761 = vrot.slane %v759, 1
    %v762 = vor.u32 %v757, %v761
    %v764 = vshll.u32 %v382, 16
    %v766 = vrot.slane %v764, 1
    %v767 = vsel %vm383, %v762, %v766
    %768 = vrot.lane.b32.xlu0 %v395, 8
    %v769 = vpop.permute.xlu0 %768
    %770 = vrot.lane.b32.xlu0 %v407, 8
    %v771 = vpop.permute.xlu0 %770
    %772 = vrot.lane.b32.xlu0 %v419, 8
    %v773 = vpop.permute.xlu0 %772
    %774 = vrot.lane.b32.xlu0 %v431, 8
    %v775 = vpop.permute.xlu0 %774
    %776 = vrot.lane.b32.xlu0 %v443, 8
    %v777 = vpop.permute.xlu0 %776
    %778 = vrot.lane.b32.xlu0 %v455, 8
    %v779 = vpop.permute.xlu0 %778
    %780 = vrot.lane.b32.xlu0 %v467, 8
    %v781 = vpop.permute.xlu0 %780
    %782 = vrot.lane.b32.xlu0 %v479, 8
    %v783 = vpop.permute.xlu0 %782
    %784 = vrot.lane.b32.xlu0 %v491, 8
    %v785 = vpop.permute.xlu0 %784
    %786 = vrot.lane.b32.xlu0 %v503, 8
    %v787 = vpop.permute.xlu0 %786
    %788 = vrot.lane.b32.xlu0 %v515, 8
    %v789 = vpop.permute.xlu0 %788
    %790 = vrot.lane.b32.xlu0 %v527, 8
    %v791 = vpop.permute.xlu0 %790
    %792 = vrot.lane.b32.xlu0 %v539, 8
    %v793 = vpop.permute.xlu0 %792
    %794 = vrot.lane.b32.xlu0 %v551, 8
    %v795 = vpop.permute.xlu0 %794
    %796 = vrot.lane.b32.xlu0 %v563, 8
    %v797 = vpop.permute.xlu0 %796
    %798 = vrot.lane.b32.xlu0 %v575, 8
    %v799 = vpop.permute.xlu0 %798
    %800 = vrot.lane.b32.xlu0 %v587, 8
    %v801 = vpop.permute.xlu0 %800
    %802 = vrot.lane.b32.xlu0 %v599, 8
    %v803 = vpop.permute.xlu0 %802
    %804 = vrot.lane.b32.xlu0 %v611, 8
    %v805 = vpop.permute.xlu0 %804
    %806 = vrot.lane.b32.xlu0 %v623, 8
    %v807 = vpop.permute.xlu0 %806
    %808 = vrot.lane.b32.xlu0 %v635, 8
    %v809 = vpop.permute.xlu0 %808
    %810 = vrot.lane.b32.xlu0 %v647, 8
    %v811 = vpop.permute.xlu0 %810
    %812 = vrot.lane.b32.xlu0 %v659, 8
    %v813 = vpop.permute.xlu0 %812
    %814 = vrot.lane.b32.xlu0 %v671, 8
    %v815 = vpop.permute.xlu0 %814
    %816 = vrot.lane.b32.xlu0 %v683, 8
    %v817 = vpop.permute.xlu0 %816
    %818 = vrot.lane.b32.xlu0 %v695, 8
    %v819 = vpop.permute.xlu0 %818
    %820 = vrot.lane.b32.xlu0 %v707, 8
    %v821 = vpop.permute.xlu0 %820
    %822 = vrot.lane.b32.xlu0 %v719, 8
    %v823 = vpop.permute.xlu0 %822
    %824 = vrot.lane.b32.xlu0 %v731, 8
    %v825 = vpop.permute.xlu0 %824
    %826 = vrot.lane.b32.xlu0 %v743, 8
    %v827 = vpop.permute.xlu0 %826
    %828 = vrot.lane.b32.xlu0 %v755, 8
    %v829 = vpop.permute.xlu0 %828
    %830 = vrot.lane.b32.xlu0 %v767, 8
    %v831 = vpop.permute.xlu0 %830
    %vm832 = vcmask 1046528
    %v833 = vrot.slane %v255, 1
    %v834 = vrot.slane %v351, 1
    %v835 = vsel %vm832, %v833, %v834
    %v836 = vrot.slane %v256, 1
    %v837 = vrot.slane %v352, 1
    %v838 = vsel %vm832, %v836, %v837
    %v839 = vrot.slane %v257, 1
    %v840 = vrot.slane %v353, 1
    %v841 = vsel %vm832, %v839, %v840
    %v842 = vrot.slane %v258, 1
    %v843 = vrot.slane %v354, 1
    %v844 = vsel %vm832, %v842, %v843
    %v845 = vrot.slane %v259, 1
    %v846 = vrot.slane %v355, 1
    %v847 = vsel %vm832, %v845, %v846
    %v848 = vrot.slane %v260, 1
    %v849 = vrot.slane %v356, 1
    %v850 = vsel %vm832, %v848, %v849
    %v851 = vrot.slane %v261, 1
    %v852 = vrot.slane %v357, 1
    %v853 = vsel %vm832, %v851, %v852
    %v854 = vrot.slane %v262, 1
    %v855 = vrot.slane %v358, 1
    %v856 = vsel %vm832, %v854, %v855
    %v857 = vrot.slane %v263, 1
    %v858 = vrot.slane %v359, 1
    %v859 = vsel %vm832, %v857, %v858
    %v860 = vrot.slane %v264, 1
    %v861 = vrot.slane %v360, 1
    %v862 = vsel %vm832, %v860, %v861
    %v863 = vrot.slane %v265, 1
    %v864 = vrot.slane %v361, 1
    %v865 = vsel %vm832, %v863, %v864
    %v866 = vrot.slane %v266, 1
    %v867 = vrot.slane %v362, 1
    %v868 = vsel %vm832, %v866, %v867
    %v869 = vrot.slane %v267, 1
    %v870 = vrot.slane %v363, 1
    %v871 = vsel %vm832, %v869, %v870
    %v872 = vrot.slane %v268, 1
    %v873 = vrot.slane %v364, 1
    %v874 = vsel %vm832, %v872, %v873
    %v875 = vrot.slane %v269, 1
    %v876 = vrot.slane %v365, 1
    %v877 = vsel %vm832, %v875, %v876
    %v878 = vrot.slane %v270, 1
    %v879 = vrot.slane %v366, 1
    %v880 = vsel %vm832, %v878, %v879
    %v881 = vrot.slane %v271, 1
    %v882 = vrot.slane %v367, 1
    %v883 = vsel %vm832, %v881, %v882
    %v884 = vrot.slane %v272, 1
    %v885 = vrot.slane %v368, 1
    %v886 = vsel %vm832, %v884, %v885
    %v887 = vrot.slane %v273, 1
    %v888 = vrot.slane %v369, 1
    %v889 = vsel %vm832, %v887, %v888
    %v890 = vrot.slane %v274, 1
    %v891 = vrot.slane %v370, 1
    %v892 = vsel %vm832, %v890, %v891
    %v893 = vrot.slane %v275, 1
    %v894 = vrot.slane %v371, 1
    %v895 = vsel %vm832, %v893, %v894
    %v896 = vrot.slane %v276, 1
    %v897 = vrot.slane %v372, 1
    %v898 = vsel %vm832, %v896, %v897
    %v899 = vrot.slane %v277, 1
    %v900 = vrot.slane %v373, 1
    %v901 = vsel %vm832, %v899, %v900
    %v902 = vrot.slane %v278, 1
    %v903 = vrot.slane %v374, 1
    %v904 = vsel %vm832, %v902, %v903
    %v905 = vrot.slane %v279, 1
    %v906 = vrot.slane %v375, 1
    %v907 = vsel %vm832, %v905, %v906
    %v908 = vrot.slane %v280, 1
    %v909 = vrot.slane %v376, 1
    %v910 = vsel %vm832, %v908, %v909
    %v911 = vrot.slane %v281, 1
    %v912 = vrot.slane %v377, 1
    %v913 = vsel %vm832, %v911, %v912
    %v914 = vrot.slane %v282, 1
    %v915 = vrot.slane %v378, 1
    %v916 = vsel %vm832, %v914, %v915
    %v917 = vrot.slane %v283, 1
    %v918 = vrot.slane %v379, 1
    %v919 = vsel %vm832, %v917, %v918
    %v920 = vrot.slane %v284, 1
    %v921 = vrot.slane %v380, 1
    %v922 = vsel %vm832, %v920, %v921
    %v923 = vrot.slane %v285, 1
    %v924 = vrot.slane %v381, 1
    %v925 = vsel %vm832, %v923, %v924
    %v926 = vrot.slane %v286, 1
    %v927 = vrot.slane %v382, 1
    %v928 = vsel %vm832, %v926, %v927
    %929 = vrot.lane.b32.xlu0 %v835, 16
    %v930 = vpop.permute.xlu0 %929
    %931 = vrot.lane.b32.xlu0 %v838, 16
    %v932 = vpop.permute.xlu0 %931
    %933 = vrot.lane.b32.xlu0 %v841, 16
    %v934 = vpop.permute.xlu0 %933
    %935 = vrot.lane.b32.xlu0 %v844, 16
    %v936 = vpop.permute.xlu0 %935
    %937 = vrot.lane.b32.xlu0 %v847, 16
    %v938 = vpop.permute.xlu0 %937
    %939 = vrot.lane.b32.xlu0 %v850, 16
    %v940 = vpop.permute.xlu0 %939
    %941 = vrot.lane.b32.xlu0 %v853, 16
    %v942 = vpop.permute.xlu0 %941
    %943 = vrot.lane.b32.xlu0 %v856, 16
    %v944 = vpop.permute.xlu0 %943
    %945 = vrot.lane.b32.xlu0 %v859, 16
    %v946 = vpop.permute.xlu0 %945
    %947 = vrot.lane.b32.xlu0 %v862, 16
    %v948 = vpop.permute.xlu0 %947
    %949 = vrot.lane.b32.xlu0 %v865, 16
    %v950 = vpop.permute.xlu0 %949
    %951 = vrot.lane.b32.xlu0 %v868, 16
    %v952 = vpop.permute.xlu0 %951
    %953 = vrot.lane.b32.xlu0 %v871, 16
    %v954 = vpop.permute.xlu0 %953
    %955 = vrot.lane.b32.xlu0 %v874, 16
    %v956 = vpop.permute.xlu0 %955
    %957 = vrot.lane.b32.xlu0 %v877, 16
    %v958 = vpop.permute.xlu0 %957
    %959 = vrot.lane.b32.xlu0 %v880, 16
    %v960 = vpop.permute.xlu0 %959
    %961 = vrot.lane.b32.xlu0 %v883, 16
    %v962 = vpop.permute.xlu0 %961
    %963 = vrot.lane.b32.xlu0 %v886, 16
    %v964 = vpop.permute.xlu0 %963
    %965 = vrot.lane.b32.xlu0 %v889, 16
    %v966 = vpop.permute.xlu0 %965
    %967 = vrot.lane.b32.xlu0 %v892, 16
    %v968 = vpop.permute.xlu0 %967
    %969 = vrot.lane.b32.xlu0 %v895, 16
    %v970 = vpop.permute.xlu0 %969
    %971 = vrot.lane.b32.xlu0 %v898, 16
    %v972 = vpop.permute.xlu0 %971
    %973 = vrot.lane.b32.xlu0 %v901, 16
    %v974 = vpop.permute.xlu0 %973
    %975 = vrot.lane.b32.xlu0 %v904, 16
    %v976 = vpop.permute.xlu0 %975
    %977 = vrot.lane.b32.xlu0 %v907, 16
    %v978 = vpop.permute.xlu0 %977
    %979 = vrot.lane.b32.xlu0 %v910, 16
    %v980 = vpop.permute.xlu0 %979
    %981 = vrot.lane.b32.xlu0 %v913, 16
    %v982 = vpop.permute.xlu0 %981
    %983 = vrot.lane.b32.xlu0 %v916, 16
    %v984 = vpop.permute.xlu0 %983
    %985 = vrot.lane.b32.xlu0 %v919, 16
    %v986 = vpop.permute.xlu0 %985
    %987 = vrot.lane.b32.xlu0 %v922, 16
    %v988 = vpop.permute.xlu0 %987
    %989 = vrot.lane.b32.xlu0 %v925, 16
    %v990 = vpop.permute.xlu0 %989
    %991 = vrot.lane.b32.xlu0 %v928, 16
    %v992 = vpop.permute.xlu0 %991
    %v997 = vunpack.c.l.b16 %v67
    %v998 = vunpack.c.l.b16 %v68
    %v999 = vunpack.c.l.b16 %v121
    %v1000 = vunpack.c.l.b16 %v122
    %v1001 = vpack.c.b16 %v998, %v997
    %v1002 = vpack.c.b16 %v1000, %v999
    %1003 = vrot.lane.b32.xlu0 %v256, 24
    %v1004 = vpop.permute.xlu0 %1003
    %1005 = vrot.lane.b32.xlu0 %v257, 24
    %v1006 = vpop.permute.xlu0 %1005
    %1007 = vrot.lane.b32.xlu0 %v258, 24
    %v1008 = vpop.permute.xlu0 %1007
    %1009 = vrot.lane.b32.xlu0 %v259, 24
    %v1010 = vpop.permute.xlu0 %1009
    %1011 = vrot.lane.b32.xlu0 %v260, 24
    %v1012 = vpop.permute.xlu0 %1011
    %1013 = vrot.lane.b32.xlu0 %v261, 24
    %v1014 = vpop.permute.xlu0 %1013
    %1015 = vrot.lane.b32.xlu0 %v262, 24
    %v1016 = vpop.permute.xlu0 %1015
    %1017 = vrot.lane.b32.xlu0 %v263, 24
    %v1018 = vpop.permute.xlu0 %1017
    %1019 = vrot.lane.b32.xlu0 %v264, 24
    %v1020 = vpop.permute.xlu0 %1019
    %1021 = vrot.lane.b32.xlu0 %v265, 24
    %v1022 = vpop.permute.xlu0 %1021
    %1023 = vrot.lane.b32.xlu0 %v266, 24
    %v1024 = vpop.permute.xlu0 %1023
    %1025 = vrot.lane.b32.xlu0 %v267, 24
    %v1026 = vpop.permute.xlu0 %1025
    %1027 = vrot.lane.b32.xlu0 %v268, 24
    %v1028 = vpop.permute.xlu0 %1027
    %1029 = vrot.lane.b32.xlu0 %v269, 24
    %v1030 = vpop.permute.xlu0 %1029
    %1031 = vrot.lane.b32.xlu0 %v270, 24
    %v1032 = vpop.permute.xlu0 %1031
    %1033 = vrot.lane.b32.xlu0 %v1001, 24
    %v1034 = vpop.permute.xlu0 %1033
    %1035 = vrot.lane.b32.xlu0 %v272, 24
    %v1036 = vpop.permute.xlu0 %1035
    %1037 = vrot.lane.b32.xlu0 %v273, 24
    %v1038 = vpop.permute.xlu0 %1037
    %1039 = vrot.lane.b32.xlu0 %v274, 24
    %v1040 = vpop.permute.xlu0 %1039
    %1041 = vrot.lane.b32.xlu0 %v275, 24
    %v1042 = vpop.permute.xlu0 %1041
    %1043 = vrot.lane.b32.xlu0 %v276, 24
    %v1044 = vpop.permute.xlu0 %1043
    %1045 = vrot.lane.b32.xlu0 %v277, 24
    %v1046 = vpop.permute.xlu0 %1045
    %1047 = vrot.lane.b32.xlu0 %v278, 24
    %v1048 = vpop.permute.xlu0 %1047
    %1049 = vrot.lane.b32.xlu0 %v279, 24
    %v1050 = vpop.permute.xlu0 %1049
    %1051 = vrot.lane.b32.xlu0 %v280, 24
    %v1052 = vpop.permute.xlu0 %1051
    %1053 = vrot.lane.b32.xlu0 %v281, 24
    %v1054 = vpop.permute.xlu0 %1053
    %1055 = vrot.lane.b32.xlu0 %v282, 24
    %v1056 = vpop.permute.xlu0 %1055
    %1057 = vrot.lane.b32.xlu0 %v283, 24
    %v1058 = vpop.permute.xlu0 %1057
    %1059 = vrot.lane.b32.xlu0 %v284, 24
    %v1060 = vpop.permute.xlu0 %1059
    %1061 = vrot.lane.b32.xlu0 %v285, 24
    %v1062 = vpop.permute.xlu0 %1061
    %1063 = vrot.lane.b32.xlu0 %v286, 24
    %v1064 = vpop.permute.xlu0 %1063
    %1065 = vrot.lane.b32.xlu0 %v1002, 24
    %v1066 = vpop.permute.xlu0 %1065
    %v1069 = vunpack.c.l.b16 %v69
    %v1070 = vunpack.c.l.b16 %v123
    %v1071 = vpack.c.b16 %v1069, %v1069
    %v1072 = vpack.c.b16 %v1070, %v1070
    %v1074 = vshrl.u32 %v1001, 16
    %v1076 = vshll.u32 %v1001, 16
    %v1078 = vrot.slane %v1076, 1
    %v1079 = vor.u32 %v1074, %v1078
    %v1081 = vshll.u32 %v1071, 16
    %v1083 = vrot.slane %v1081, 1
    %v1084 = vsel %vm383, %v1079, %v1083
    %v1086 = vshrl.u32 %v1002, 16
    %v1088 = vshll.u32 %v1002, 16
    %v1090 = vrot.slane %v1088, 1
    %v1091 = vor.u32 %v1086, %v1090
    %v1093 = vshll.u32 %v1072, 16
    %v1095 = vrot.slane %v1093, 1
    %v1096 = vsel %vm383, %v1091, %v1095
    %1097 = vrot.lane.b32.xlu0 %v407, 32
    %v1098 = vpop.permute.xlu0 %1097
    %1099 = vrot.lane.b32.xlu0 %v419, 32
    %v1100 = vpop.permute.xlu0 %1099
    %1101 = vrot.lane.b32.xlu0 %v431, 32
    %v1102 = vpop.permute.xlu0 %1101
    %1103 = vrot.lane.b32.xlu0 %v443, 32
    %v1104 = vpop.permute.xlu0 %1103
    %1105 = vrot.lane.b32.xlu0 %v455, 32
    %v1106 = vpop.permute.xlu0 %1105
    %1107 = vrot.lane.b32.xlu0 %v467, 32
    %v1108 = vpop.permute.xlu0 %1107
    %1109 = vrot.lane.b32.xlu0 %v479, 32
    %v1110 = vpop.permute.xlu0 %1109
    %1111 = vrot.lane.b32.xlu0 %v491, 32
    %v1112 = vpop.permute.xlu0 %1111
    %1113 = vrot.lane.b32.xlu0 %v503, 32
    %v1114 = vpop.permute.xlu0 %1113
    %1115 = vrot.lane.b32.xlu0 %v515, 32
    %v1116 = vpop.permute.xlu0 %1115
    %1117 = vrot.lane.b32.xlu0 %v527, 32
    %v1118 = vpop.permute.xlu0 %1117
    %1119 = vrot.lane.b32.xlu0 %v539, 32
    %v1120 = vpop.permute.xlu0 %1119
    %1121 = vrot.lane.b32.xlu0 %v551, 32
    %v1122 = vpop.permute.xlu0 %1121
    %1123 = vrot.lane.b32.xlu0 %v563, 32
    %v1124 = vpop.permute.xlu0 %1123
    %1125 = vrot.lane.b32.xlu0 %v575, 32
    %v1126 = vpop.permute.xlu0 %1125
    %1127 = vrot.lane.b32.xlu0 %v1084, 32
    %v1128 = vpop.permute.xlu0 %1127
    %1129 = vrot.lane.b32.xlu0 %v599, 32
    %v1130 = vpop.permute.xlu0 %1129
    %1131 = vrot.lane.b32.xlu0 %v611, 32
    %v1132 = vpop.permute.xlu0 %1131
    %1133 = vrot.lane.b32.xlu0 %v623, 32
    %v1134 = vpop.permute.xlu0 %1133
    %1135 = vrot.lane.b32.xlu0 %v635, 32
    %v1136 = vpop.permute.xlu0 %1135
    %1137 = vrot.lane.b32.xlu0 %v647, 32
    %v1138 = vpop.permute.xlu0 %1137
    %1139 = vrot.lane.b32.xlu0 %v659, 32
    %v1140 = vpop.permute.xlu0 %1139
    %1141 = vrot.lane.b32.xlu0 %v671, 32
    %v1142 = vpop.permute.xlu0 %1141
    %1143 = vrot.lane.b32.xlu0 %v683, 32
    %v1144 = vpop.permute.xlu0 %1143
    %1145 = vrot.lane.b32.xlu0 %v695, 32
    %v1146 = vpop.permute.xlu0 %1145
    %1147 = vrot.lane.b32.xlu0 %v707, 32
    %v1148 = vpop.permute.xlu0 %1147
    %1149 = vrot.lane.b32.xlu0 %v719, 32
    %v1150 = vpop.permute.xlu0 %1149
    %1151 = vrot.lane.b32.xlu0 %v731, 32
    %v1152 = vpop.permute.xlu0 %1151
    %1153 = vrot.lane.b32.xlu0 %v743, 32
    %v1154 = vpop.permute.xlu0 %1153
    %1155 = vrot.lane.b32.xlu0 %v755, 32
    %v1156 = vpop.permute.xlu0 %1155
    %1157 = vrot.lane.b32.xlu0 %v767, 32
    %v1158 = vpop.permute.xlu0 %1157
    %1159 = vrot.lane.b32.xlu0 %v1096, 32
    %v1160 = vpop.permute.xlu0 %1159
    %v1161 = vrot.slane %v1001, 1
    %v1162 = vrot.slane %v1071, 1
    %v1163 = vsel %vm832, %v1161, %v1162
    %v1164 = vrot.slane %v1002, 1
    %v1165 = vrot.slane %v1072, 1
    %v1166 = vsel %vm832, %v1164, %v1165
    %1167 = vrot.lane.b32.xlu0 %v838, 40
    %v1168 = vpop.permute.xlu0 %1167
    %1169 = vrot.lane.b32.xlu0 %v841, 40
    %v1170 = vpop.permute.xlu0 %1169
    %1171 = vrot.lane.b32.xlu0 %v844, 40
    %v1172 = vpop.permute.xlu0 %1171
    %1173 = vrot.lane.b32.xlu0 %v847, 40
    %v1174 = vpop.permute.xlu0 %1173
    %1175 = vrot.lane.b32.xlu0 %v850, 40
    %v1176 = vpop.permute.xlu0 %1175
    %1177 = vrot.lane.b32.xlu0 %v853, 40
    %v1178 = vpop.permute.xlu0 %1177
    %1179 = vrot.lane.b32.xlu0 %v856, 40
    %v1180 = vpop.permute.xlu0 %1179
    %1181 = vrot.lane.b32.xlu0 %v859, 40
    %v1182 = vpop.permute.xlu0 %1181
    %1183 = vrot.lane.b32.xlu0 %v862, 40
    %v1184 = vpop.permute.xlu0 %1183
    %1185 = vrot.lane.b32.xlu0 %v865, 40
    %v1186 = vpop.permute.xlu0 %1185
    %1187 = vrot.lane.b32.xlu0 %v868, 40
    %v1188 = vpop.permute.xlu0 %1187
    %1189 = vrot.lane.b32.xlu0 %v871, 40
    %v1190 = vpop.permute.xlu0 %1189
    %1191 = vrot.lane.b32.xlu0 %v874, 40
    %v1192 = vpop.permute.xlu0 %1191
    %1193 = vrot.lane.b32.xlu0 %v877, 40
    %v1194 = vpop.permute.xlu0 %1193
    %1195 = vrot.lane.b32.xlu0 %v880, 40
    %v1196 = vpop.permute.xlu0 %1195
    %1197 = vrot.lane.b32.xlu0 %v1163, 40
    %v1198 = vpop.permute.xlu0 %1197
    %1199 = vrot.lane.b32.xlu0 %v886, 40
    %v1200 = vpop.permute.xlu0 %1199
    %1201 = vrot.lane.b32.xlu0 %v889, 40
    %v1202 = vpop.permute.xlu0 %1201
    %1203 = vrot.lane.b32.xlu0 %v892, 40
    %v1204 = vpop.permute.xlu0 %1203
    %1205 = vrot.lane.b32.xlu0 %v895, 40
    %v1206 = vpop.permute.xlu0 %1205
    %1207 = vrot.lane.b32.xlu0 %v898, 40
    %v1208 = vpop.permute.xlu0 %1207
    %1209 = vrot.lane.b32.xlu0 %v901, 40
    %v1210 = vpop.permute.xlu0 %1209
    %1211 = vrot.lane.b32.xlu0 %v904, 40
    %v1212 = vpop.permute.xlu0 %1211
    %1213 = vrot.lane.b32.xlu0 %v907, 40
    %v1214 = vpop.permute.xlu0 %1213
    %1215 = vrot.lane.b32.xlu0 %v910, 40
    %v1216 = vpop.permute.xlu0 %1215
    %1217 = vrot.lane.b32.xlu0 %v913, 40
    %v1218 = vpop.permute.xlu0 %1217
    %1219 = vrot.lane.b32.xlu0 %v916, 40
    %v1220 = vpop.permute.xlu0 %1219
    %1221 = vrot.lane.b32.xlu0 %v919, 40
    %v1222 = vpop.permute.xlu0 %1221
    %1223 = vrot.lane.b32.xlu0 %v922, 40
    %v1224 = vpop.permute.xlu0 %1223
    %1225 = vrot.lane.b32.xlu0 %v925, 40
    %v1226 = vpop.permute.xlu0 %1225
    %1227 = vrot.lane.b32.xlu0 %v928, 40
    %v1228 = vpop.permute.xlu0 %1227
    %1229 = vrot.lane.b32.xlu0 %v1166, 40
    %v1230 = vpop.permute.xlu0 %1229
    %v1235 = vunpack.c.l.b16 %v70
    %v1236 = vunpack.c.l.b16 %v71
    %v1237 = vunpack.c.l.b16 %v124
    %v1238 = vunpack.c.l.b16 %v125
    %v1239 = vpack.c.b16 %v1236, %v1235
    %v1240 = vpack.c.b16 %v1238, %v1237
    %1241 = vrot.lane.b32.xlu0 %v257, 48
    %v1242 = vpop.permute.xlu0 %1241
    %1243 = vrot.lane.b32.xlu0 %v258, 48
    %v1244 = vpop.permute.xlu0 %1243
    %1245 = vrot.lane.b32.xlu0 %v259, 48
    %v1246 = vpop.permute.xlu0 %1245
    %1247 = vrot.lane.b32.xlu0 %v260, 48
    %v1248 = vpop.permute.xlu0 %1247
    %1249 = vrot.lane.b32.xlu0 %v261, 48
    %v1250 = vpop.permute.xlu0 %1249
    %1251 = vrot.lane.b32.xlu0 %v262, 48
    %v1252 = vpop.permute.xlu0 %1251
    %1253 = vrot.lane.b32.xlu0 %v263, 48
    %v1254 = vpop.permute.xlu0 %1253
    %1255 = vrot.lane.b32.xlu0 %v264, 48
    %v1256 = vpop.permute.xlu0 %1255
    %1257 = vrot.lane.b32.xlu0 %v265, 48
    %v1258 = vpop.permute.xlu0 %1257
    %1259 = vrot.lane.b32.xlu0 %v266, 48
    %v1260 = vpop.permute.xlu0 %1259
    %1261 = vrot.lane.b32.xlu0 %v267, 48
    %v1262 = vpop.permute.xlu0 %1261
    %1263 = vrot.lane.b32.xlu0 %v268, 48
    %v1264 = vpop.permute.xlu0 %1263
    %1265 = vrot.lane.b32.xlu0 %v269, 48
    %v1266 = vpop.permute.xlu0 %1265
    %1267 = vrot.lane.b32.xlu0 %v270, 48
    %v1268 = vpop.permute.xlu0 %1267
    %1269 = vrot.lane.b32.xlu0 %v1001, 48
    %v1270 = vpop.permute.xlu0 %1269
    %1271 = vrot.lane.b32.xlu0 %v1239, 48
    %v1272 = vpop.permute.xlu0 %1271
    %1273 = vrot.lane.b32.xlu0 %v273, 48
    %v1274 = vpop.permute.xlu0 %1273
    %1275 = vrot.lane.b32.xlu0 %v274, 48
    %v1276 = vpop.permute.xlu0 %1275
    %1277 = vrot.lane.b32.xlu0 %v275, 48
    %v1278 = vpop.permute.xlu0 %1277
    %1279 = vrot.lane.b32.xlu0 %v276, 48
    %v1280 = vpop.permute.xlu0 %1279
    %1281 = vrot.lane.b32.xlu0 %v277, 48
    %v1282 = vpop.permute.xlu0 %1281
    %1283 = vrot.lane.b32.xlu0 %v278, 48
    %v1284 = vpop.permute.xlu0 %1283
    %1285 = vrot.lane.b32.xlu0 %v279, 48
    %v1286 = vpop.permute.xlu0 %1285
    %1287 = vrot.lane.b32.xlu0 %v280, 48
    %v1288 = vpop.permute.xlu0 %1287
    %1289 = vrot.lane.b32.xlu0 %v281, 48
    %v1290 = vpop.permute.xlu0 %1289
    %1291 = vrot.lane.b32.xlu0 %v282, 48
    %v1292 = vpop.permute.xlu0 %1291
    %1293 = vrot.lane.b32.xlu0 %v283, 48
    %v1294 = vpop.permute.xlu0 %1293
    %1295 = vrot.lane.b32.xlu0 %v284, 48
    %v1296 = vpop.permute.xlu0 %1295
    %1297 = vrot.lane.b32.xlu0 %v285, 48
    %v1298 = vpop.permute.xlu0 %1297
    %1299 = vrot.lane.b32.xlu0 %v286, 48
    %v1300 = vpop.permute.xlu0 %1299
    %1301 = vrot.lane.b32.xlu0 %v1002, 48
    %v1302 = vpop.permute.xlu0 %1301
    %1303 = vrot.lane.b32.xlu0 %v1240, 48
    %v1304 = vpop.permute.xlu0 %1303
    %v1307 = vunpack.c.l.b16 %v72
    %v1308 = vunpack.c.l.b16 %v126
    %v1309 = vpack.c.b16 %v1307, %v1307
    %v1310 = vpack.c.b16 %v1308, %v1308
    %v1312 = vshrl.u32 %v1239, 16
    %v1314 = vshll.u32 %v1239, 16
    %v1316 = vrot.slane %v1314, 1
    %v1317 = vor.u32 %v1312, %v1316
    %v1319 = vshll.u32 %v1309, 16
    %v1321 = vrot.slane %v1319, 1
    %v1322 = vsel %vm383, %v1317, %v1321
    %v1324 = vshrl.u32 %v1240, 16
    %v1326 = vshll.u32 %v1240, 16
    %v1328 = vrot.slane %v1326, 1
    %v1329 = vor.u32 %v1324, %v1328
    %v1331 = vshll.u32 %v1310, 16
    %v1333 = vrot.slane %v1331, 1
    %v1334 = vsel %vm383, %v1329, %v1333
    %1335 = vrot.lane.b32.xlu0 %v419, 56
    %v1336 = vpop.permute.xlu0 %1335
    %1337 = vrot.lane.b32.xlu0 %v431, 56
    %v1338 = vpop.permute.xlu0 %1337
    %1339 = vrot.lane.b32.xlu0 %v443, 56
    %v1340 = vpop.permute.xlu0 %1339
    %1341 = vrot.lane.b32.xlu0 %v455, 56
    %v1342 = vpop.permute.xlu0 %1341
    %1343 = vrot.lane.b32.xlu0 %v467, 56
    %v1344 = vpop.permute.xlu0 %1343
    %1345 = vrot.lane.b32.xlu0 %v479, 56
    %v1346 = vpop.permute.xlu0 %1345
    %1347 = vrot.lane.b32.xlu0 %v491, 56
    %v1348 = vpop.permute.xlu0 %1347
    %1349 = vrot.lane.b32.xlu0 %v503, 56
    %v1350 = vpop.permute.xlu0 %1349
    %1351 = vrot.lane.b32.xlu0 %v515, 56
    %v1352 = vpop.permute.xlu0 %1351
    %1353 = vrot.lane.b32.xlu0 %v527, 56
    %v1354 = vpop.permute.xlu0 %1353
    %1355 = vrot.lane.b32.xlu0 %v539, 56
    %v1356 = vpop.permute.xlu0 %1355
    %1357 = vrot.lane.b32.xlu0 %v551, 56
    %v1358 = vpop.permute.xlu0 %1357
    %1359 = vrot.lane.b32.xlu0 %v563, 56
    %v1360 = vpop.permute.xlu0 %1359
    %1361 = vrot.lane.b32.xlu0 %v575, 56
    %v1362 = vpop.permute.xlu0 %1361
    %1363 = vrot.lane.b32.xlu0 %v1084, 56
    %v1364 = vpop.permute.xlu0 %1363
    %1365 = vrot.lane.b32.xlu0 %v1322, 56
    %v1366 = vpop.permute.xlu0 %1365
    %1367 = vrot.lane.b32.xlu0 %v611, 56
    %v1368 = vpop.permute.xlu0 %1367
    %1369 = vrot.lane.b32.xlu0 %v623, 56
    %v1370 = vpop.permute.xlu0 %1369
    %1371 = vrot.lane.b32.xlu0 %v635, 56
    %v1372 = vpop.permute.xlu0 %1371
    %1373 = vrot.lane.b32.xlu0 %v647, 56
    %v1374 = vpop.permute.xlu0 %1373
    %1375 = vrot.lane.b32.xlu0 %v659, 56
    %v1376 = vpop.permute.xlu0 %1375
    %1377 = vrot.lane.b32.xlu0 %v671, 56
    %v1378 = vpop.permute.xlu0 %1377
    %1379 = vrot.lane.b32.xlu0 %v683, 56
    %v1380 = vpop.permute.xlu0 %1379
    %1381 = vrot.lane.b32.xlu0 %v695, 56
    %v1382 = vpop.permute.xlu0 %1381
    %1383 = vrot.lane.b32.xlu0 %v707, 56
    %v1384 = vpop.permute.xlu0 %1383
    %1385 = vrot.lane.b32.xlu0 %v719, 56
    %v1386 = vpop.permute.xlu0 %1385
    %1387 = vrot.lane.b32.xlu0 %v731, 56
    %v1388 = vpop.permute.xlu0 %1387
    %1389 = vrot.lane.b32.xlu0 %v743, 56
    %v1390 = vpop.permute.xlu0 %1389
    %1391 = vrot.lane.b32.xlu0 %v755, 56
    %v1392 = vpop.permute.xlu0 %1391
    %1393 = vrot.lane.b32.xlu0 %v767, 56
    %v1394 = vpop.permute.xlu0 %1393
    %1395 = vrot.lane.b32.xlu0 %v1096, 56
    %v1396 = vpop.permute.xlu0 %1395
    %1397 = vrot.lane.b32.xlu0 %v1334, 56
    %v1398 = vpop.permute.xlu0 %1397
    %v1399 = vrot.slane %v1239, 1
    %v1400 = vrot.slane %v1309, 1
    %v1401 = vsel %vm832, %v1399, %v1400
    %v1402 = vrot.slane %v1240, 1
    %v1403 = vrot.slane %v1310, 1
    %v1404 = vsel %vm832, %v1402, %v1403
    %1405 = vrot.lane.b32.xlu0 %v841, 64
    %v1406 = vpop.permute.xlu0 %1405
    %1407 = vrot.lane.b32.xlu0 %v844, 64
    %v1408 = vpop.permute.xlu0 %1407
    %1409 = vrot.lane.b32.xlu0 %v847, 64
    %v1410 = vpop.permute.xlu0 %1409
    %1411 = vrot.lane.b32.xlu0 %v850, 64
    %v1412 = vpop.permute.xlu0 %1411
    %1413 = vrot.lane.b32.xlu0 %v853, 64
    %v1414 = vpop.permute.xlu0 %1413
    %1415 = vrot.lane.b32.xlu0 %v856, 64
    %v1416 = vpop.permute.xlu0 %1415
    %1417 = vrot.lane.b32.xlu0 %v859, 64
    %v1418 = vpop.permute.xlu0 %1417
    %1419 = vrot.lane.b32.xlu0 %v862, 64
    %v1420 = vpop.permute.xlu0 %1419
    %1421 = vrot.lane.b32.xlu0 %v865, 64
    %v1422 = vpop.permute.xlu0 %1421
    %1423 = vrot.lane.b32.xlu0 %v868, 64
    %v1424 = vpop.permute.xlu0 %1423
    %1425 = vrot.lane.b32.xlu0 %v871, 64
    %v1426 = vpop.permute.xlu0 %1425
    %1427 = vrot.lane.b32.xlu0 %v874, 64
    %v1428 = vpop.permute.xlu0 %1427
    %1429 = vrot.lane.b32.xlu0 %v877, 64
    %v1430 = vpop.permute.xlu0 %1429
    %1431 = vrot.lane.b32.xlu0 %v880, 64
    %v1432 = vpop.permute.xlu0 %1431
    %1433 = vrot.lane.b32.xlu0 %v1163, 64
    %v1434 = vpop.permute.xlu0 %1433
    %1435 = vrot.lane.b32.xlu0 %v1401, 64
    %v1436 = vpop.permute.xlu0 %1435
    %1437 = vrot.lane.b32.xlu0 %v889, 64
    %v1438 = vpop.permute.xlu0 %1437
    %1439 = vrot.lane.b32.xlu0 %v892, 64
    %v1440 = vpop.permute.xlu0 %1439
    %1441 = vrot.lane.b32.xlu0 %v895, 64
    %v1442 = vpop.permute.xlu0 %1441
    %1443 = vrot.lane.b32.xlu0 %v898, 64
    %v1444 = vpop.permute.xlu0 %1443
    %1445 = vrot.lane.b32.xlu0 %v901, 64
    %v1446 = vpop.permute.xlu0 %1445
    %1447 = vrot.lane.b32.xlu0 %v904, 64
    %v1448 = vpop.permute.xlu0 %1447
    %1449 = vrot.lane.b32.xlu0 %v907, 64
    %v1450 = vpop.permute.xlu0 %1449
    %1451 = vrot.lane.b32.xlu0 %v910, 64
    %v1452 = vpop.permute.xlu0 %1451
    %1453 = vrot.lane.b32.xlu0 %v913, 64
    %v1454 = vpop.permute.xlu0 %1453
    %1455 = vrot.lane.b32.xlu0 %v916, 64
    %v1456 = vpop.permute.xlu0 %1455
    %1457 = vrot.lane.b32.xlu0 %v919, 64
    %v1458 = vpop.permute.xlu0 %1457
    %1459 = vrot.lane.b32.xlu0 %v922, 64
    %v1460 = vpop.permute.xlu0 %1459
    %1461 = vrot.lane.b32.xlu0 %v925, 64
    %v1462 = vpop.permute.xlu0 %1461
    %1463 = vrot.lane.b32.xlu0 %v928, 64
    %v1464 = vpop.permute.xlu0 %1463
    %1465 = vrot.lane.b32.xlu0 %v1166, 64
    %v1466 = vpop.permute.xlu0 %1465
    %1467 = vrot.lane.b32.xlu0 %v1404, 64
    %v1468 = vpop.permute.xlu0 %1467
    %vm1469 = vcmask 64512
    %v1471 = vsel %vm1469, %v255, %v769
    %v1473 = vsel %vm1469, %v256, %v771
    %v1475 = vsel %vm1469, %v257, %v773
    %v1477 = vsel %vm1469, %v258, %v775
    %v1479 = vsel %vm1469, %v259, %v777
    %v1481 = vsel %vm1469, %v260, %v779
    %v1483 = vsel %vm1469, %v261, %v781
    %v1485 = vsel %vm1469, %v262, %v783
    %v1487 = vsel %vm1469, %v263, %v785
    %v1489 = vsel %vm1469, %v264, %v787
    %v1491 = vsel %vm1469, %v265, %v789
    %v1493 = vsel %vm1469, %v266, %v791
    %v1495 = vsel %vm1469, %v267, %v793
    %v1497 = vsel %vm1469, %v268, %v795
    %v1499 = vsel %vm1469, %v269, %v797
    %v1501 = vsel %vm1469, %v270, %v799
    %v1503 = vsel %vm1469, %v271, %v801
    %v1505 = vsel %vm1469, %v272, %v803
    %v1507 = vsel %vm1469, %v273, %v805
    %v1509 = vsel %vm1469, %v274, %v807
    %v1511 = vsel %vm1469, %v275, %v809
    %v1513 = vsel %vm1469, %v276, %v811
    %v1515 = vsel %vm1469, %v277, %v813
    %v1517 = vsel %vm1469, %v278, %v815
    %v1519 = vsel %vm1469, %v279, %v817
    %v1521 = vsel %vm1469, %v280, %v819
    %v1523 = vsel %vm1469, %v281, %v821
    %v1525 = vsel %vm1469, %v282, %v823
    %v1527 = vsel %vm1469, %v283, %v825
    %v1529 = vsel %vm1469, %v284, %v827
    %v1531 = vsel %vm1469, %v285, %v829
    %v1533 = vsel %vm1469, %v286, %v831
    %vm1534 = vcmask 130048
    %v1536 = vsel %vm1534, %v1471, %v930
    %v1538 = vsel %vm1534, %v1473, %v932
    %v1540 = vsel %vm1534, %v1475, %v934
    %v1542 = vsel %vm1534, %v1477, %v936
    %v1544 = vsel %vm1534, %v1479, %v938
    %v1546 = vsel %vm1534, %v1481, %v940
    %v1548 = vsel %vm1534, %v1483, %v942
    %v1550 = vsel %vm1534, %v1485, %v944
    %v1552 = vsel %vm1534, %v1487, %v946
    %v1554 = vsel %vm1534, %v1489, %v948
    %v1556 = vsel %vm1534, %v1491, %v950
    %v1558 = vsel %vm1534, %v1493, %v952
    %v1560 = vsel %vm1534, %v1495, %v954
    %v1562 = vsel %vm1534, %v1497, %v956
    %v1564 = vsel %vm1534, %v1499, %v958
    %v1566 = vsel %vm1534, %v1501, %v960
    %v1568 = vsel %vm1534, %v1503, %v962
    %v1570 = vsel %vm1534, %v1505, %v964
    %v1572 = vsel %vm1534, %v1507, %v966
    %v1574 = vsel %vm1534, %v1509, %v968
    %v1576 = vsel %vm1534, %v1511, %v970
    %v1578 = vsel %vm1534, %v1513, %v972
    %v1580 = vsel %vm1534, %v1515, %v974
    %v1582 = vsel %vm1534, %v1517, %v976
    %v1584 = vsel %vm1534, %v1519, %v978
    %v1586 = vsel %vm1534, %v1521, %v980
    %v1588 = vsel %vm1534, %v1523, %v982
    %v1590 = vsel %vm1534, %v1525, %v984
    %v1592 = vsel %vm1534, %v1527, %v986
    %v1594 = vsel %vm1534, %v1529, %v988
    %v1596 = vsel %vm1534, %v1531, %v990
    %v1598 = vsel %vm1534, %v1533, %v992
    %vm1599 = vcmask 195584
    %v1601 = vsel %vm1599, %v1536, %v1004
    %v1603 = vsel %vm1599, %v1538, %v1006
    %v1605 = vsel %vm1599, %v1540, %v1008
    %v1607 = vsel %vm1599, %v1542, %v1010
    %v1609 = vsel %vm1599, %v1544, %v1012
    %v1611 = vsel %vm1599, %v1546, %v1014
    %v1613 = vsel %vm1599, %v1548, %v1016
    %v1615 = vsel %vm1599, %v1550, %v1018
    %v1617 = vsel %vm1599, %v1552, %v1020
    %v1619 = vsel %vm1599, %v1554, %v1022
    %v1621 = vsel %vm1599, %v1556, %v1024
    %v1623 = vsel %vm1599, %v1558, %v1026
    %v1625 = vsel %vm1599, %v1560, %v1028
    %v1627 = vsel %vm1599, %v1562, %v1030
    %v1629 = vsel %vm1599, %v1564, %v1032
    %v1631 = vsel %vm1599, %v1566, %v1034
    %v1633 = vsel %vm1599, %v1568, %v1036
    %v1635 = vsel %vm1599, %v1570, %v1038
    %v1637 = vsel %vm1599, %v1572, %v1040
    %v1639 = vsel %vm1599, %v1574, %v1042
    %v1641 = vsel %vm1599, %v1576, %v1044
    %v1643 = vsel %vm1599, %v1578, %v1046
    %v1645 = vsel %vm1599, %v1580, %v1048
    %v1647 = vsel %vm1599, %v1582, %v1050
    %v1649 = vsel %vm1599, %v1584, %v1052
    %v1651 = vsel %vm1599, %v1586, %v1054
    %v1653 = vsel %vm1599, %v1588, %v1056
    %v1655 = vsel %vm1599, %v1590, %v1058
    %v1657 = vsel %vm1599, %v1592, %v1060
    %v1659 = vsel %vm1599, %v1594, %v1062
    %v1661 = vsel %vm1599, %v1596, %v1064
    %v1663 = vsel %vm1599, %v1598, %v1066
    %vm1664 = vcmask 261120
    %v1666 = vsel %vm1664, %v1601, %v1098
    %v1668 = vsel %vm1664, %v1603, %v1100
    %v1670 = vsel %vm1664, %v1605, %v1102
    %v1672 = vsel %vm1664, %v1607, %v1104
    %v1674 = vsel %vm1664, %v1609, %v1106
    %v1676 = vsel %vm1664, %v1611, %v1108
    %v1678 = vsel %vm1664, %v1613, %v1110
    %v1680 = vsel %vm1664, %v1615, %v1112
    %v1682 = vsel %vm1664, %v1617, %v1114
    %v1684 = vsel %vm1664, %v1619, %v1116
    %v1686 = vsel %vm1664, %v1621, %v1118
    %v1688 = vsel %vm1664, %v1623, %v1120
    %v1690 = vsel %vm1664, %v1625, %v1122
    %v1692 = vsel %vm1664, %v1627, %v1124
    %v1694 = vsel %vm1664, %v1629, %v1126
    %v1696 = vsel %vm1664, %v1631, %v1128
    %v1698 = vsel %vm1664, %v1633, %v1130
    %v1700 = vsel %vm1664, %v1635, %v1132
    %v1702 = vsel %vm1664, %v1637, %v1134
    %v1704 = vsel %vm1664, %v1639, %v1136
    %v1706 = vsel %vm1664, %v1641, %v1138
    %v1708 = vsel %vm1664, %v1643, %v1140
    %v1710 = vsel %vm1664, %v1645, %v1142
    %v1712 = vsel %vm1664, %v1647, %v1144
    %v1714 = vsel %vm1664, %v1649, %v1146
    %v1716 = vsel %vm1664, %v1651, %v1148
    %v1718 = vsel %vm1664, %v1653, %v1150
    %v1720 = vsel %vm1664, %v1655, %v1152
    %v1722 = vsel %vm1664, %v1657, %v1154
    %v1724 = vsel %vm1664, %v1659, %v1156
    %v1726 = vsel %vm1664, %v1661, %v1158
    %v1728 = vsel %vm1664, %v1663, %v1160
    %vm1729 = vcmask 326656
    %v1731 = vsel %vm1729, %v1666, %v1168
    %v1733 = vsel %vm1729, %v1668, %v1170
    %v1735 = vsel %vm1729, %v1670, %v1172
    %v1737 = vsel %vm1729, %v1672, %v1174
    %v1739 = vsel %vm1729, %v1674, %v1176
    %v1741 = vsel %vm1729, %v1676, %v1178
    %v1743 = vsel %vm1729, %v1678, %v1180
    %v1745 = vsel %vm1729, %v1680, %v1182
    %v1747 = vsel %vm1729, %v1682, %v1184
    %v1749 = vsel %vm1729, %v1684, %v1186
    %v1751 = vsel %vm1729, %v1686, %v1188
    %v1753 = vsel %vm1729, %v1688, %v1190
    %v1755 = vsel %vm1729, %v1690, %v1192
    %v1757 = vsel %vm1729, %v1692, %v1194
    %v1759 = vsel %vm1729, %v1694, %v1196
    %v1761 = vsel %vm1729, %v1696, %v1198
    %v1763 = vsel %vm1729, %v1698, %v1200
    %v1765 = vsel %vm1729, %v1700, %v1202
    %v1767 = vsel %vm1729, %v1702, %v1204
    %v1769 = vsel %vm1729, %v1704, %v1206
    %v1771 = vsel %vm1729, %v1706, %v1208
    %v1773 = vsel %vm1729, %v1708, %v1210
    %v1775 = vsel %vm1729, %v1710, %v1212
    %v1777 = vsel %vm1729, %v1712, %v1214
    %v1779 = vsel %vm1729, %v1714, %v1216
    %v1781 = vsel %vm1729, %v1716, %v1218
    %v1783 = vsel %vm1729, %v1718, %v1220
    %v1785 = vsel %vm1729, %v1720, %v1222
    %v1787 = vsel %vm1729, %v1722, %v1224
    %v1789 = vsel %vm1729, %v1724, %v1226
    %v1791 = vsel %vm1729, %v1726, %v1228
    %v1793 = vsel %vm1729, %v1728, %v1230
    %vm1794 = vcmask 392192
    %v1796 = vsel %vm1794, %v1731, %v1242
    %v1798 = vsel %vm1794, %v1733, %v1244
    %v1800 = vsel %vm1794, %v1735, %v1246
    %v1802 = vsel %vm1794, %v1737, %v1248
    %v1804 = vsel %vm1794, %v1739, %v1250
    %v1806 = vsel %vm1794, %v1741, %v1252
    %v1808 = vsel %vm1794, %v1743, %v1254
    %v1810 = vsel %vm1794, %v1745, %v1256
    %v1812 = vsel %vm1794, %v1747, %v1258
    %v1814 = vsel %vm1794, %v1749, %v1260
    %v1816 = vsel %vm1794, %v1751, %v1262
    %v1818 = vsel %vm1794, %v1753, %v1264
    %v1820 = vsel %vm1794, %v1755, %v1266
    %v1822 = vsel %vm1794, %v1757, %v1268
    %v1824 = vsel %vm1794, %v1759, %v1270
    %v1826 = vsel %vm1794, %v1761, %v1272
    %v1828 = vsel %vm1794, %v1763, %v1274
    %v1830 = vsel %vm1794, %v1765, %v1276
    %v1832 = vsel %vm1794, %v1767, %v1278
    %v1834 = vsel %vm1794, %v1769, %v1280
    %v1836 = vsel %vm1794, %v1771, %v1282
    %v1838 = vsel %vm1794, %v1773, %v1284
    %v1840 = vsel %vm1794, %v1775, %v1286
    %v1842 = vsel %vm1794, %v1777, %v1288
    %v1844 = vsel %vm1794, %v1779, %v1290
    %v1846 = vsel %vm1794, %v1781, %v1292
    %v1848 = vsel %vm1794, %v1783, %v1294
    %v1850 = vsel %vm1794, %v1785, %v1296
    %v1852 = vsel %vm1794, %v1787, %v1298
    %v1854 = vsel %vm1794, %v1789, %v1300
    %v1856 = vsel %vm1794, %v1791, %v1302
    %v1858 = vsel %vm1794, %v1793, %v1304
    %vm1859 = vcmask 457728
    %v1861 = vsel %vm1859, %v1796, %v1336
    %v1863 = vsel %vm1859, %v1798, %v1338
    %v1865 = vsel %vm1859, %v1800, %v1340
    %v1867 = vsel %vm1859, %v1802, %v1342
    %v1869 = vsel %vm1859, %v1804, %v1344
    %v1871 = vsel %vm1859, %v1806, %v1346
    %v1873 = vsel %vm1859, %v1808, %v1348
    %v1875 = vsel %vm1859, %v1810, %v1350
    %v1877 = vsel %vm1859, %v1812, %v1352
    %v1879 = vsel %vm1859, %v1814, %v1354
    %v1881 = vsel %vm1859, %v1816, %v1356
    %v1883 = vsel %vm1859, %v1818, %v1358
    %v1885 = vsel %vm1859, %v1820, %v1360
    %v1887 = vsel %vm1859, %v1822, %v1362
    %v1889 = vsel %vm1859, %v1824, %v1364
    %v1891 = vsel %vm1859, %v1826, %v1366
    %v1893 = vsel %vm1859, %v1828, %v1368
    %v1895 = vsel %vm1859, %v1830, %v1370
    %v1897 = vsel %vm1859, %v1832, %v1372
    %v1899 = vsel %vm1859, %v1834, %v1374
    %v1901 = vsel %vm1859, %v1836, %v1376
    %v1903 = vsel %vm1859, %v1838, %v1378
    %v1905 = vsel %vm1859, %v1840, %v1380
    %v1907 = vsel %vm1859, %v1842, %v1382
    %v1909 = vsel %vm1859, %v1844, %v1384
    %v1911 = vsel %vm1859, %v1846, %v1386
    %v1913 = vsel %vm1859, %v1848, %v1388
    %v1915 = vsel %vm1859, %v1850, %v1390
    %v1917 = vsel %vm1859, %v1852, %v1392
    %v1919 = vsel %vm1859, %v1854, %v1394
    %v1921 = vsel %vm1859, %v1856, %v1396
    %v1923 = vsel %vm1859, %v1858, %v1398
    %vm1924 = vcmask 523264
    %v1926 = vsel %vm1924, %v1861, %v1406
    %v1928 = vsel %vm1924, %v1863, %v1408
    %v1930 = vsel %vm1924, %v1865, %v1410
    %v1932 = vsel %vm1924, %v1867, %v1412
    %v1934 = vsel %vm1924, %v1869, %v1414
    %v1936 = vsel %vm1924, %v1871, %v1416
    %v1938 = vsel %vm1924, %v1873, %v1418
    %v1940 = vsel %vm1924, %v1875, %v1420
    %v1942 = vsel %vm1924, %v1877, %v1422
    %v1944 = vsel %vm1924, %v1879, %v1424
    %v1946 = vsel %vm1924, %v1881, %v1426
    %v1948 = vsel %vm1924, %v1883, %v1428
    %v1950 = vsel %vm1924, %v1885, %v1430
    %v1952 = vsel %vm1924, %v1887, %v1432
    %v1954 = vsel %vm1924, %v1889, %v1434
    %v1956 = vsel %vm1924, %v1891, %v1436
    %v1958 = vsel %vm1924, %v1893, %v1438
    %v1960 = vsel %vm1924, %v1895, %v1440
    %v1962 = vsel %vm1924, %v1897, %v1442
    %v1964 = vsel %vm1924, %v1899, %v1444
    %v1966 = vsel %vm1924, %v1901, %v1446
    %v1968 = vsel %vm1924, %v1903, %v1448
    %v1970 = vsel %vm1924, %v1905, %v1450
    %v1972 = vsel %vm1924, %v1907, %v1452
    %v1974 = vsel %vm1924, %v1909, %v1454
    %v1976 = vsel %vm1924, %v1911, %v1456
    %v1978 = vsel %vm1924, %v1913, %v1458
    %v1980 = vsel %vm1924, %v1915, %v1460
    %v1982 = vsel %vm1924, %v1917, %v1462
    %v1984 = vsel %vm1924, %v1919, %v1464
    %v1986 = vsel %vm1924, %v1921, %v1466
    %v1988 = vsel %vm1924, %v1923, %v1468
    %v1989 = vld [vmem:[%s1] sm:$0xf]
    %v1990 = vld [vmem:[%s1 + $0x4] sm:$0xf]
    %v1991 = vld [vmem:[%s1 + $0x8] sm:$0xf]
    %v1992 = vld [vmem:[%s1 + $0xc] sm:$0xf]
    %v1993 = vld [vmem:[%s1 + $0x10] sm:$0xf]
    %v1994 = vld [vmem:[%s1 + $0x14] sm:$0xf]
    %v1995 = vld [vmem:[%s1 + $0x18] sm:$0xf]
    %v1996 = vld [vmem:[%s1 + $0x1c] sm:$0xf]
    %v1997 = vld [vmem:[%s1 + $0x20] sm:$0xf]
    %v2007 = vunpack.c.l.b16 %v1989
    %v2008 = vunpack.c.l.b16 %v1990
    %v2009 = vunpack.c.l.b16 %v1991
    %v2010 = vunpack.c.l.b16 %v1992
    %v2011 = vunpack.c.l.b16 %v1993
    %v2012 = vunpack.c.l.b16 %v1994
    %v2013 = vunpack.c.l.b16 %v1995
    %v2014 = vunpack.c.l.b16 %v1996
    %v2015 = vunpack.c.l.b16 %v1997
    %v2016 = vpack.c.b16 %v2008, %v2007
    %v2017 = vpack.c.b16 %v2010, %v2009
    %v2018 = vpack.c.b16 %v2012, %v2011
    %v2019 = vpack.c.b16 %v2014, %v2013
    %v2020 = vpack.c.b16 %v2015, %v2015
    %vm2025 = vcmask 588800
    %v2026 = vsel %vm2025, %v1926, 0
    %v2028 = vsel %vm2025, %v1928, 0
    %v2030 = vsel %vm2025, %v1930, 0
    %v2032 = vsel %vm2025, %v1932, 0
    %v2034 = vsel %vm2025, %v1934, 0
    %v2036 = vsel %vm2025, %v1936, 0
    %v2038 = vsel %vm2025, %v1938, 0
    %v2040 = vsel %vm2025, %v1940, 0
    %v2042 = vsel %vm2025, %v1942, 0
    %v2044 = vsel %vm2025, %v1944, 0
    %v2046 = vsel %vm2025, %v1946, 0
    %v2048 = vsel %vm2025, %v1948, 0
    %v2050 = vsel %vm2025, %v1950, 0
    %v2052 = vsel %vm2025, %v1952, 0
    %v2054 = vsel %vm2025, %v1954, 0
    %v2056 = vsel %vm2025, %v1956, 0
    %v2058 = vsel %vm2025, %v1958, 0
    %v2060 = vsel %vm2025, %v1960, 0
    %v2062 = vsel %vm2025, %v1962, 0
    %v2064 = vsel %vm2025, %v1964, 0
    %v2066 = vsel %vm2025, %v1966, 0
    %v2068 = vsel %vm2025, %v1968, 0
    %v2070 = vsel %vm2025, %v1970, 0
    %v2072 = vsel %vm2025, %v1972, 0
    %v2074 = vsel %vm2025, %v1974, 0
    %v2076 = vsel %vm2025, %v1976, 0
    %v2078 = vsel %vm2025, %v1978, 0
    %v2080 = vsel %vm2025, %v1980, 0
    %v2082 = vsel %vm2025, %v1982, 0
    %v2084 = vsel %vm2025, %v1984, 0
    %v2086 = vsel %vm2025, %v1986, 0
    %v2088 = vsel %vm2025, %v1988, 0
    %vm2090 = vcmask 1043456
    %v2092 = vsel %vm2090, %v2020, 0
    %2094 = vmatpush.bf16.msra.mxu0 0
    %2095 = vmatpush.bf16.msra.mxu0 0
    %2096 = vmatpush.bf16.msra.mxu0 0
    %2097 = vmatpush.bf16.msra.mxu0 %v2092
    %2098 = vmatpush.bf16.msra.mxu0 %v2019
    %2099 = vmatpush.bf16.msra.mxu0 %v2018
    %2100 = vmatpush.bf16.msra.mxu0 %v2017
    %2101 = vmatpush.bf16.msra.mxu0 %v2016
    %2102 = vmatmul.bf16.gmra.mxu0 %v2026
    %v2103 = vpop.f32.mrf.mxu0
    %v2104 = vadd.f32 0.0, %v2103
    %v2105 = vpop.f32.mrf.mxu0
    %v2106 = vadd.f32 0.0, %v2105
    %2107 = vmatmul.bf16.gmra.mxu0 %v2028
    %v2108 = vpop.f32.mrf.mxu0
    %v2109 = vadd.f32 0.0, %v2108
    %v2110 = vpop.f32.mrf.mxu0
    %v2111 = vadd.f32 0.0, %v2110
    %2112 = vmatmul.bf16.gmra.mxu0 %v2030
    %v2113 = vpop.f32.mrf.mxu0
    %v2114 = vadd.f32 0.0, %v2113
    %v2115 = vpop.f32.mrf.mxu0
    %v2116 = vadd.f32 0.0, %v2115
    %2117 = vmatmul.bf16.gmra.mxu0 %v2032
    %v2118 = vpop.f32.mrf.mxu0
    %v2119 = vadd.f32 0.0, %v2118
    %v2120 = vpop.f32.mrf.mxu0
    %v2121 = vadd.f32 0.0, %v2120
    %2122 = vmatmul.bf16.gmra.mxu0 %v2034
    %v2123 = vpop.f32.mrf.mxu0
    %v2124 = vadd.f32 0.0, %v2123
    %v2125 = vpop.f32.mrf.mxu0
    %v2126 = vadd.f32 0.0, %v2125
    %2127 = vmatmul.bf16.gmra.mxu0 %v2036
    %v2128 = vpop.f32.mrf.mxu0
    %v2129 = vadd.f32 0.0, %v2128
    %v2130 = vpop.f32.mrf.mxu0
    %v2131 = vadd.f32 0.0, %v2130
    %2132 = vmatmul.bf16.gmra.mxu0 %v2038
    %v2133 = vpop.f32.mrf.mxu0
    %v2134 = vadd.f32 0.0, %v2133
    %v2135 = vpop.f32.mrf.mxu0
    %v2136 = vadd.f32 0.0, %v2135
    %2137 = vmatmul.bf16.gmra.mxu0 %v2040
    %v2138 = vpop.f32.mrf.mxu0
    %v2139 = vadd.f32 0.0, %v2138
    %v2140 = vpop.f32.mrf.mxu0
    %v2141 = vadd.f32 0.0, %v2140
    %2142 = vmatmul.bf16.gmra.mxu0 %v2042
    %v2143 = vpop.f32.mrf.mxu0
    %v2144 = vadd.f32 0.0, %v2143
    %v2145 = vpop.f32.mrf.mxu0
    %v2146 = vadd.f32 0.0, %v2145
    %2147 = vmatmul.bf16.gmra.mxu0 %v2044
    %v2148 = vpop.f32.mrf.mxu0
    %v2149 = vadd.f32 0.0, %v2148
    %v2150 = vpop.f32.mrf.mxu0
    %v2151 = vadd.f32 0.0, %v2150
    %2152 = vmatmul.bf16.gmra.mxu0 %v2046
    %v2153 = vpop.f32.mrf.mxu0
    %v2154 = vadd.f32 0.0, %v2153
    %v2155 = vpop.f32.mrf.mxu0
    %v2156 = vadd.f32 0.0, %v2155
    %2157 = vmatmul.bf16.gmra.mxu0 %v2048
    %v2158 = vpop.f32.mrf.mxu0
    %v2159 = vadd.f32 0.0, %v2158
    %v2160 = vpop.f32.mrf.mxu0
    %v2161 = vadd.f32 0.0, %v2160
    %2162 = vmatmul.bf16.gmra.mxu0 %v2050
    %v2163 = vpop.f32.mrf.mxu0
    %v2164 = vadd.f32 0.0, %v2163
    %v2165 = vpop.f32.mrf.mxu0
    %v2166 = vadd.f32 0.0, %v2165
    %2167 = vmatmul.bf16.gmra.mxu0 %v2052
    %v2168 = vpop.f32.mrf.mxu0
    %v2169 = vadd.f32 0.0, %v2168
    %v2170 = vpop.f32.mrf.mxu0
    %v2171 = vadd.f32 0.0, %v2170
    %2172 = vmatmul.bf16.gmra.mxu0 %v2054
    %v2173 = vpop.f32.mrf.mxu0
    %v2174 = vadd.f32 0.0, %v2173
    %v2175 = vpop.f32.mrf.mxu0
    %v2176 = vadd.f32 0.0, %v2175
    %2177 = vmatmul.bf16.gmra.mxu0 %v2056
    %v2178 = vpop.f32.mrf.mxu0
    %v2179 = vadd.f32 0.0, %v2178
    %v2180 = vpop.f32.mrf.mxu0
    %v2181 = vadd.f32 0.0, %v2180
    %2182 = vmatmul.bf16.gmra.mxu0 %v2058
    %v2183 = vpop.f32.mrf.mxu0
    %v2184 = vadd.f32 0.0, %v2183
    %v2185 = vpop.f32.mrf.mxu0
    %v2186 = vadd.f32 0.0, %v2185
    %2187 = vmatmul.bf16.gmra.mxu0 %v2060
    %v2188 = vpop.f32.mrf.mxu0
    %v2189 = vadd.f32 0.0, %v2188
    %v2190 = vpop.f32.mrf.mxu0
    %v2191 = vadd.f32 0.0, %v2190
    %2192 = vmatmul.bf16.gmra.mxu0 %v2062
    %v2193 = vpop.f32.mrf.mxu0
    %v2194 = vadd.f32 0.0, %v2193
    %v2195 = vpop.f32.mrf.mxu0
    %v2196 = vadd.f32 0.0, %v2195
    %2197 = vmatmul.bf16.gmra.mxu0 %v2064
    %v2198 = vpop.f32.mrf.mxu0
    %v2199 = vadd.f32 0.0, %v2198
    %v2200 = vpop.f32.mrf.mxu0
    %v2201 = vadd.f32 0.0, %v2200
    %2202 = vmatmul.bf16.gmra.mxu0 %v2066
    %v2203 = vpop.f32.mrf.mxu0
    %v2204 = vadd.f32 0.0, %v2203
    %v2205 = vpop.f32.mrf.mxu0
    %v2206 = vadd.f32 0.0, %v2205
    %2207 = vmatmul.bf16.gmra.mxu0 %v2068
    %v2208 = vpop.f32.mrf.mxu0
    %v2209 = vadd.f32 0.0, %v2208
    %v2210 = vpop.f32.mrf.mxu0
    %v2211 = vadd.f32 0.0, %v2210
    %2212 = vmatmul.bf16.gmra.mxu0 %v2070
    %v2213 = vpop.f32.mrf.mxu0
    %v2214 = vadd.f32 0.0, %v2213
    %v2215 = vpop.f32.mrf.mxu0
    %v2216 = vadd.f32 0.0, %v2215
    %2217 = vmatmul.bf16.gmra.mxu0 %v2072
    %v2218 = vpop.f32.mrf.mxu0
    %v2219 = vadd.f32 0.0, %v2218
    %v2220 = vpop.f32.mrf.mxu0
    %v2221 = vadd.f32 0.0, %v2220
    %2222 = vmatmul.bf16.gmra.mxu0 %v2074
    %v2223 = vpop.f32.mrf.mxu0
    %v2224 = vadd.f32 0.0, %v2223
    %v2225 = vpop.f32.mrf.mxu0
    %v2226 = vadd.f32 0.0, %v2225
    %2227 = vmatmul.bf16.gmra.mxu0 %v2076
    %v2228 = vpop.f32.mrf.mxu0
    %v2229 = vadd.f32 0.0, %v2228
    %v2230 = vpop.f32.mrf.mxu0
    %v2231 = vadd.f32 0.0, %v2230
    %2232 = vmatmul.bf16.gmra.mxu0 %v2078
    %v2233 = vpop.f32.mrf.mxu0
    %v2234 = vadd.f32 0.0, %v2233
    %v2235 = vpop.f32.mrf.mxu0
    %v2236 = vadd.f32 0.0, %v2235
    %2237 = vmatmul.bf16.gmra.mxu0 %v2080
    %v2238 = vpop.f32.mrf.mxu0
    %v2239 = vadd.f32 0.0, %v2238
    %v2240 = vpop.f32.mrf.mxu0
    %v2241 = vadd.f32 0.0, %v2240
    %2242 = vmatmul.bf16.gmra.mxu0 %v2082
    %v2243 = vpop.f32.mrf.mxu0
    %v2244 = vadd.f32 0.0, %v2243
    %v2245 = vpop.f32.mrf.mxu0
    %v2246 = vadd.f32 0.0, %v2245
    %2247 = vmatmul.bf16.gmra.mxu0 %v2084
    %v2248 = vpop.f32.mrf.mxu0
    %v2249 = vadd.f32 0.0, %v2248
    %v2250 = vpop.f32.mrf.mxu0
    %v2251 = vadd.f32 0.0, %v2250
    %2252 = vmatmul.bf16.gmra.mxu0 %v2086
    %v2253 = vpop.f32.mrf.mxu0
    %v2254 = vadd.f32 0.0, %v2253
    %v2255 = vpop.f32.mrf.mxu0
    %v2256 = vadd.f32 0.0, %v2255
    %2257 = vmatmul.bf16.gmra.mxu0 %v2088
    %v2258 = vpop.f32.mrf.mxu0
    %v2259 = vadd.f32 0.0, %v2258
    %v2260 = vpop.f32.mrf.mxu0
    %v2261 = vadd.f32 0.0, %v2260
    %2262 = vdwg.mxu0
    %v2263 = vadd.f32 %v2104, %v2106
    %v2264 = vadd.f32 %v2263, %v2109
    %v2265 = vadd.f32 %v2264, %v2111
    %v2266 = vadd.f32 %v2265, %v2114
    %v2267 = vadd.f32 %v2266, %v2116
    %v2268 = vadd.f32 %v2267, %v2119
    %v2269 = vadd.f32 %v2268, %v2121
    %v2270 = vadd.f32 %v2269, %v2124
    %v2271 = vadd.f32 %v2270, %v2126
    %v2272 = vadd.f32 %v2271, %v2129
    %v2273 = vadd.f32 %v2272, %v2131
    %v2274 = vadd.f32 %v2273, %v2134
    %v2275 = vadd.f32 %v2274, %v2136
    %v2276 = vadd.f32 %v2275, %v2139
    %v2277 = vadd.f32 %v2276, %v2141
    %v2278 = vadd.f32 %v2277, %v2144
    %v2279 = vadd.f32 %v2278, %v2146
    %v2280 = vadd.f32 %v2279, %v2149
    %v2281 = vadd.f32 %v2280, %v2151
    %v2282 = vadd.f32 %v2281, %v2154
    %v2283 = vadd.f32 %v2282, %v2156
    %v2284 = vadd.f32 %v2283, %v2159
    %v2285 = vadd.f32 %v2284, %v2161
    %v2286 = vadd.f32 %v2285, %v2164
    %v2287 = vadd.f32 %v2286, %v2166
    %v2288 = vadd.f32 %v2287, %v2169
    %v2289 = vadd.f32 %v2288, %v2171
    %v2290 = vadd.f32 %v2289, %v2174
    %v2291 = vadd.f32 %v2290, %v2176
    %v2292 = vadd.f32 %v2291, %v2179
    %v2293 = vadd.f32 %v2292, %v2181
    %v2294 = vadd.f32 %v2293, %v2184
    %v2295 = vadd.f32 %v2294, %v2186
    %v2296 = vadd.f32 %v2295, %v2189
    %v2297 = vadd.f32 %v2296, %v2191
    %v2298 = vadd.f32 %v2297, %v2194
    %v2299 = vadd.f32 %v2298, %v2196
    %v2300 = vadd.f32 %v2299, %v2199
    %v2301 = vadd.f32 %v2300, %v2201
    %v2302 = vadd.f32 %v2301, %v2204
    %v2303 = vadd.f32 %v2302, %v2206
    %v2304 = vadd.f32 %v2303, %v2209
    %v2305 = vadd.f32 %v2304, %v2211
    %v2306 = vadd.f32 %v2305, %v2214
    %v2307 = vadd.f32 %v2306, %v2216
    %v2308 = vadd.f32 %v2307, %v2219
    %v2309 = vadd.f32 %v2308, %v2221
    %v2310 = vadd.f32 %v2309, %v2224
    %v2311 = vadd.f32 %v2310, %v2226
    %v2312 = vadd.f32 %v2311, %v2229
    %v2313 = vadd.f32 %v2312, %v2231
    %v2314 = vadd.f32 %v2313, %v2234
    %v2315 = vadd.f32 %v2314, %v2236
    %v2316 = vadd.f32 %v2315, %v2239
    %v2317 = vadd.f32 %v2316, %v2241
    %v2318 = vadd.f32 %v2317, %v2244
    %v2319 = vadd.f32 %v2318, %v2246
    %v2320 = vadd.f32 %v2319, %v2249
    %v2321 = vadd.f32 %v2320, %v2251
    %v2322 = vadd.f32 %v2321, %v2254
    %v2323 = vadd.f32 %v2322, %v2256
    %v2324 = vadd.f32 %v2323, %v2259
    %v2325 = vadd.f32 %v2324, %v2261
    %v2326 = vrot.slane %v2325, 4
    %v2327 = vadd.f32 %v2325, %v2326
    %v2328 = vrot.slane %v2327, 2
    %v2329 = vadd.f32 %v2327, %v2328
    %v2330 = vrot.slane %v2329, 1
    %v2331 = vadd.f32 %v2329, %v2330
    %v2332 = vmul.f32 %v2331, 0.001953125
    %v2333 = vsub.f32 %v2104, %v2332
    %v2334 = vsub.f32 %v2106, %v2332
    %v2335 = vsub.f32 %v2109, %v2332
    %v2336 = vsub.f32 %v2111, %v2332
    %v2337 = vsub.f32 %v2114, %v2332
    %v2338 = vsub.f32 %v2116, %v2332
    %v2339 = vsub.f32 %v2119, %v2332
    %v2340 = vsub.f32 %v2121, %v2332
    %v2341 = vsub.f32 %v2124, %v2332
    %v2342 = vsub.f32 %v2126, %v2332
    %v2343 = vsub.f32 %v2129, %v2332
    %v2344 = vsub.f32 %v2131, %v2332
    %v2345 = vsub.f32 %v2134, %v2332
    %v2346 = vsub.f32 %v2136, %v2332
    %v2347 = vsub.f32 %v2139, %v2332
    %v2348 = vsub.f32 %v2141, %v2332
    %v2349 = vsub.f32 %v2144, %v2332
    %v2350 = vsub.f32 %v2146, %v2332
    %v2351 = vsub.f32 %v2149, %v2332
    %v2352 = vsub.f32 %v2151, %v2332
    %v2353 = vsub.f32 %v2154, %v2332
    %v2354 = vsub.f32 %v2156, %v2332
    %v2355 = vsub.f32 %v2159, %v2332
    %v2356 = vsub.f32 %v2161, %v2332
    %v2357 = vsub.f32 %v2164, %v2332
    %v2358 = vsub.f32 %v2166, %v2332
    %v2359 = vsub.f32 %v2169, %v2332
    %v2360 = vsub.f32 %v2171, %v2332
    %v2361 = vsub.f32 %v2174, %v2332
    %v2362 = vsub.f32 %v2176, %v2332
    %v2363 = vsub.f32 %v2179, %v2332
    %v2364 = vsub.f32 %v2181, %v2332
    %v2365 = vsub.f32 %v2184, %v2332
    %v2366 = vsub.f32 %v2186, %v2332
    %v2367 = vsub.f32 %v2189, %v2332
    %v2368 = vsub.f32 %v2191, %v2332
    %v2369 = vsub.f32 %v2194, %v2332
    %v2370 = vsub.f32 %v2196, %v2332
    %v2371 = vsub.f32 %v2199, %v2332
    %v2372 = vsub.f32 %v2201, %v2332
    %v2373 = vsub.f32 %v2204, %v2332
    %v2374 = vsub.f32 %v2206, %v2332
    %v2375 = vsub.f32 %v2209, %v2332
    %v2376 = vsub.f32 %v2211, %v2332
    %v2377 = vsub.f32 %v2214, %v2332
    %v2378 = vsub.f32 %v2216, %v2332
    %v2379 = vsub.f32 %v2219, %v2332
    %v2380 = vsub.f32 %v2221, %v2332
    %v2381 = vsub.f32 %v2224, %v2332
    %v2382 = vsub.f32 %v2226, %v2332
    %v2383 = vsub.f32 %v2229, %v2332
    %v2384 = vsub.f32 %v2231, %v2332
    %v2385 = vsub.f32 %v2234, %v2332
    %v2386 = vsub.f32 %v2236, %v2332
    %v2387 = vsub.f32 %v2239, %v2332
    %v2388 = vsub.f32 %v2241, %v2332
    %v2389 = vsub.f32 %v2244, %v2332
    %v2390 = vsub.f32 %v2246, %v2332
    %v2391 = vsub.f32 %v2249, %v2332
    %v2392 = vsub.f32 %v2251, %v2332
    %v2393 = vsub.f32 %v2254, %v2332
    %v2394 = vsub.f32 %v2256, %v2332
    %v2395 = vsub.f32 %v2259, %v2332
    %v2396 = vsub.f32 %v2261, %v2332
    %v2397 = vmul.f32 %v2333, %v2333
    %v2398 = vmul.f32 %v2334, %v2334
    %v2399 = vmul.f32 %v2335, %v2335
    %v2400 = vmul.f32 %v2336, %v2336
    %v2401 = vmul.f32 %v2337, %v2337
    %v2402 = vmul.f32 %v2338, %v2338
    %v2403 = vmul.f32 %v2339, %v2339
    %v2404 = vmul.f32 %v2340, %v2340
    %v2405 = vmul.f32 %v2341, %v2341
    %v2406 = vmul.f32 %v2342, %v2342
    %v2407 = vmul.f32 %v2343, %v2343
    %v2408 = vmul.f32 %v2344, %v2344
    %v2409 = vmul.f32 %v2345, %v2345
    %v2410 = vmul.f32 %v2346, %v2346
    %v2411 = vmul.f32 %v2347, %v2347
    %v2412 = vmul.f32 %v2348, %v2348
    %v2413 = vmul.f32 %v2349, %v2349
    %v2414 = vmul.f32 %v2350, %v2350
    %v2415 = vmul.f32 %v2351, %v2351
    %v2416 = vmul.f32 %v2352, %v2352
    %v2417 = vmul.f32 %v2353, %v2353
    %v2418 = vmul.f32 %v2354, %v2354
    %v2419 = vmul.f32 %v2355, %v2355
    %v2420 = vmul.f32 %v2356, %v2356
    %v2421 = vmul.f32 %v2357, %v2357
    %v2422 = vmul.f32 %v2358, %v2358
    %v2423 = vmul.f32 %v2359, %v2359
    %v2424 = vmul.f32 %v2360, %v2360
    %v2425 = vmul.f32 %v2361, %v2361
    %v2426 = vmul.f32 %v2362, %v2362
    %v2427 = vmul.f32 %v2363, %v2363
    %v2428 = vmul.f32 %v2364, %v2364
    %v2429 = vmul.f32 %v2365, %v2365
    %v2430 = vmul.f32 %v2366, %v2366
    %v2431 = vmul.f32 %v2367, %v2367
    %v2432 = vmul.f32 %v2368, %v2368
    %v2433 = vmul.f32 %v2369, %v2369
    %v2434 = vmul.f32 %v2370, %v2370
    %v2435 = vmul.f32 %v2371, %v2371
    %v2436 = vmul.f32 %v2372, %v2372
    %v2437 = vmul.f32 %v2373, %v2373
    %v2438 = vmul.f32 %v2374, %v2374
    %v2439 = vmul.f32 %v2375, %v2375
    %v2440 = vmul.f32 %v2376, %v2376
    %v2441 = vmul.f32 %v2377, %v2377
    %v2442 = vmul.f32 %v2378, %v2378
    %v2443 = vmul.f32 %v2379, %v2379
    %v2444 = vmul.f32 %v2380, %v2380
    %v2445 = vmul.f32 %v2381, %v2381
    %v2446 = vmul.f32 %v2382, %v2382
    %v2447 = vmul.f32 %v2383, %v2383
    %v2448 = vmul.f32 %v2384, %v2384
    %v2449 = vmul.f32 %v2385, %v2385
    %v2450 = vmul.f32 %v2386, %v2386
    %v2451 = vmul.f32 %v2387, %v2387
    %v2452 = vmul.f32 %v2388, %v2388
    %v2453 = vmul.f32 %v2389, %v2389
    %v2454 = vmul.f32 %v2390, %v2390
    %v2455 = vmul.f32 %v2391, %v2391
    %v2456 = vmul.f32 %v2392, %v2392
    %v2457 = vmul.f32 %v2393, %v2393
    %v2458 = vmul.f32 %v2394, %v2394
    %v2459 = vmul.f32 %v2395, %v2395
    %v2460 = vmul.f32 %v2396, %v2396
    %v2461 = vadd.f32 %v2397, %v2398
    %v2462 = vadd.f32 %v2461, %v2399
    %v2463 = vadd.f32 %v2462, %v2400
    %v2464 = vadd.f32 %v2463, %v2401
    %v2465 = vadd.f32 %v2464, %v2402
    %v2466 = vadd.f32 %v2465, %v2403
    %v2467 = vadd.f32 %v2466, %v2404
    %v2468 = vadd.f32 %v2467, %v2405
    %v2469 = vadd.f32 %v2468, %v2406
    %v2470 = vadd.f32 %v2469, %v2407
    %v2471 = vadd.f32 %v2470, %v2408
    %v2472 = vadd.f32 %v2471, %v2409
    %v2473 = vadd.f32 %v2472, %v2410
    %v2474 = vadd.f32 %v2473, %v2411
    %v2475 = vadd.f32 %v2474, %v2412
    %v2476 = vadd.f32 %v2475, %v2413
    %v2477 = vadd.f32 %v2476, %v2414
    %v2478 = vadd.f32 %v2477, %v2415
    %v2479 = vadd.f32 %v2478, %v2416
    %v2480 = vadd.f32 %v2479, %v2417
    %v2481 = vadd.f32 %v2480, %v2418
    %v2482 = vadd.f32 %v2481, %v2419
    %v2483 = vadd.f32 %v2482, %v2420
    %v2484 = vadd.f32 %v2483, %v2421
    %v2485 = vadd.f32 %v2484, %v2422
    %v2486 = vadd.f32 %v2485, %v2423
    %v2487 = vadd.f32 %v2486, %v2424
    %v2488 = vadd.f32 %v2487, %v2425
    %v2489 = vadd.f32 %v2488, %v2426
    %v2490 = vadd.f32 %v2489, %v2427
    %v2491 = vadd.f32 %v2490, %v2428
    %v2492 = vadd.f32 %v2491, %v2429
    %v2493 = vadd.f32 %v2492, %v2430
    %v2494 = vadd.f32 %v2493, %v2431
    %v2495 = vadd.f32 %v2494, %v2432
    %v2496 = vadd.f32 %v2495, %v2433
    %v2497 = vadd.f32 %v2496, %v2434
    %v2498 = vadd.f32 %v2497, %v2435
    %v2499 = vadd.f32 %v2498, %v2436
    %v2500 = vadd.f32 %v2499, %v2437
    %v2501 = vadd.f32 %v2500, %v2438
    %v2502 = vadd.f32 %v2501, %v2439
    %v2503 = vadd.f32 %v2502, %v2440
    %v2504 = vadd.f32 %v2503, %v2441
    %v2505 = vadd.f32 %v2504, %v2442
    %v2506 = vadd.f32 %v2505, %v2443
    %v2507 = vadd.f32 %v2506, %v2444
    %v2508 = vadd.f32 %v2507, %v2445
    %v2509 = vadd.f32 %v2508, %v2446
    %v2510 = vadd.f32 %v2509, %v2447
    %v2511 = vadd.f32 %v2510, %v2448
    %v2512 = vadd.f32 %v2511, %v2449
    %v2513 = vadd.f32 %v2512, %v2450
    %v2514 = vadd.f32 %v2513, %v2451
    %v2515 = vadd.f32 %v2514, %v2452
    %v2516 = vadd.f32 %v2515, %v2453
    %v2517 = vadd.f32 %v2516, %v2454
    %v2518 = vadd.f32 %v2517, %v2455
    %v2519 = vadd.f32 %v2518, %v2456
    %v2520 = vadd.f32 %v2519, %v2457
    %v2521 = vadd.f32 %v2520, %v2458
    %v2522 = vadd.f32 %v2521, %v2459
    %v2523 = vadd.f32 %v2522, %v2460
    %v2524 = vrot.slane %v2523, 4
    %v2525 = vadd.f32 %v2523, %v2524
    %v2526 = vrot.slane %v2525, 2
    %v2527 = vadd.f32 %v2525, %v2526
    %v2528 = vrot.slane %v2527, 1
    %v2529 = vadd.f32 %v2527, %v2528
    %v2530 = vmul.f32 %v2529, 0.001953125
    %v2531 = vld [vmem:[%s2] sm:$0x1]
    %v2532 = vadd.f32 %v2530, 1e-05
    %v2533 = vrsqrt.pop %v2532
    %v2534 = vmul.f32 %v2533, %v2532
    %v2535 = vmul.f32 %v2534, %v2533
    %v2536 = vmul.f32 0.5, %v2535
    %v2537 = vsub.f32 1.5, %v2536
    %v2538 = vmul.f32 %v2533, %v2537
    %vm2539 = vweird.f32 %v2532
    %vm2540 = vweird.f32 %v2533
    %vm2541 = vmor %vm2539, %vm2540
    %v2542 = vsel %vm2541, %v2533, %v2538
    %v2543 = vmul.f32 %v2531, %v2542
    %v2545 = vperm.slane %v2543, 0
    %v2547 = vmul.f32 %v2333, %v2545
    %v2548 = vmul.f32 %v2334, %v2545
    %v2549 = vmul.f32 %v2335, %v2545
    %v2550 = vmul.f32 %v2336, %v2545
    %v2551 = vmul.f32 %v2337, %v2545
    %v2552 = vmul.f32 %v2338, %v2545
    %v2553 = vmul.f32 %v2339, %v2545
    %v2554 = vmul.f32 %v2340, %v2545
    %v2555 = vmul.f32 %v2341, %v2545
    %v2556 = vmul.f32 %v2342, %v2545
    %v2557 = vmul.f32 %v2343, %v2545
    %v2558 = vmul.f32 %v2344, %v2545
    %v2559 = vmul.f32 %v2345, %v2545
    %v2560 = vmul.f32 %v2346, %v2545
    %v2561 = vmul.f32 %v2347, %v2545
    %v2562 = vmul.f32 %v2348, %v2545
    %v2563 = vmul.f32 %v2349, %v2545
    %v2564 = vmul.f32 %v2350, %v2545
    %v2565 = vmul.f32 %v2351, %v2545
    %v2566 = vmul.f32 %v2352, %v2545
    %v2567 = vmul.f32 %v2353, %v2545
    %v2568 = vmul.f32 %v2354, %v2545
    %v2569 = vmul.f32 %v2355, %v2545
    %v2570 = vmul.f32 %v2356, %v2545
    %v2571 = vmul.f32 %v2357, %v2545
    %v2572 = vmul.f32 %v2358, %v2545
    %v2573 = vmul.f32 %v2359, %v2545
    %v2574 = vmul.f32 %v2360, %v2545
    %v2575 = vmul.f32 %v2361, %v2545
    %v2576 = vmul.f32 %v2362, %v2545
    %v2577 = vmul.f32 %v2363, %v2545
    %v2578 = vmul.f32 %v2364, %v2545
    %v2579 = vmul.f32 %v2365, %v2545
    %v2580 = vmul.f32 %v2366, %v2545
    %v2581 = vmul.f32 %v2367, %v2545
    %v2582 = vmul.f32 %v2368, %v2545
    %v2583 = vmul.f32 %v2369, %v2545
    %v2584 = vmul.f32 %v2370, %v2545
    %v2585 = vmul.f32 %v2371, %v2545
    %v2586 = vmul.f32 %v2372, %v2545
    %v2587 = vmul.f32 %v2373, %v2545
    %v2588 = vmul.f32 %v2374, %v2545
    %v2589 = vmul.f32 %v2375, %v2545
    %v2590 = vmul.f32 %v2376, %v2545
    %v2591 = vmul.f32 %v2377, %v2545
    %v2592 = vmul.f32 %v2378, %v2545
    %v2593 = vmul.f32 %v2379, %v2545
    %v2594 = vmul.f32 %v2380, %v2545
    %v2595 = vmul.f32 %v2381, %v2545
    %v2596 = vmul.f32 %v2382, %v2545
    %v2597 = vmul.f32 %v2383, %v2545
    %v2598 = vmul.f32 %v2384, %v2545
    %v2599 = vmul.f32 %v2385, %v2545
    %v2600 = vmul.f32 %v2386, %v2545
    %v2601 = vmul.f32 %v2387, %v2545
    %v2602 = vmul.f32 %v2388, %v2545
    %v2603 = vmul.f32 %v2389, %v2545
    %v2604 = vmul.f32 %v2390, %v2545
    %v2605 = vmul.f32 %v2391, %v2545
    %v2606 = vmul.f32 %v2392, %v2545
    %v2607 = vmul.f32 %v2393, %v2545
    %v2608 = vmul.f32 %v2394, %v2545
    %v2609 = vmul.f32 %v2395, %v2545
    %v2610 = vmul.f32 %v2396, %v2545
    %v2611 = vld [vmem:[%s3] sm:$0x1]
    %v2613 = vperm.slane %v2611, 0
    %v2615 = vadd.f32 %v2547, %v2613
    %v2616 = vadd.f32 %v2548, %v2613
    %v2617 = vadd.f32 %v2549, %v2613
    %v2618 = vadd.f32 %v2550, %v2613
    %v2619 = vadd.f32 %v2551, %v2613
    %v2620 = vadd.f32 %v2552, %v2613
    %v2621 = vadd.f32 %v2553, %v2613
    %v2622 = vadd.f32 %v2554, %v2613
    %v2623 = vadd.f32 %v2555, %v2613
    %v2624 = vadd.f32 %v2556, %v2613
    %v2625 = vadd.f32 %v2557, %v2613
    %v2626 = vadd.f32 %v2558, %v2613
    %v2627 = vadd.f32 %v2559, %v2613
    %v2628 = vadd.f32 %v2560, %v2613
    %v2629 = vadd.f32 %v2561, %v2613
    %v2630 = vadd.f32 %v2562, %v2613
    %v2631 = vadd.f32 %v2563, %v2613
    %v2632 = vadd.f32 %v2564, %v2613
    %v2633 = vadd.f32 %v2565, %v2613
    %v2634 = vadd.f32 %v2566, %v2613
    %v2635 = vadd.f32 %v2567, %v2613
    %v2636 = vadd.f32 %v2568, %v2613
    %v2637 = vadd.f32 %v2569, %v2613
    %v2638 = vadd.f32 %v2570, %v2613
    %v2639 = vadd.f32 %v2571, %v2613
    %v2640 = vadd.f32 %v2572, %v2613
    %v2641 = vadd.f32 %v2573, %v2613
    %v2642 = vadd.f32 %v2574, %v2613
    %v2643 = vadd.f32 %v2575, %v2613
    %v2644 = vadd.f32 %v2576, %v2613
    %v2645 = vadd.f32 %v2577, %v2613
    %v2646 = vadd.f32 %v2578, %v2613
    %v2647 = vadd.f32 %v2579, %v2613
    %v2648 = vadd.f32 %v2580, %v2613
    %v2649 = vadd.f32 %v2581, %v2613
    %v2650 = vadd.f32 %v2582, %v2613
    %v2651 = vadd.f32 %v2583, %v2613
    %v2652 = vadd.f32 %v2584, %v2613
    %v2653 = vadd.f32 %v2585, %v2613
    %v2654 = vadd.f32 %v2586, %v2613
    %v2655 = vadd.f32 %v2587, %v2613
    %v2656 = vadd.f32 %v2588, %v2613
    %v2657 = vadd.f32 %v2589, %v2613
    %v2658 = vadd.f32 %v2590, %v2613
    %v2659 = vadd.f32 %v2591, %v2613
    %v2660 = vadd.f32 %v2592, %v2613
    %v2661 = vadd.f32 %v2593, %v2613
    %v2662 = vadd.f32 %v2594, %v2613
    %v2663 = vadd.f32 %v2595, %v2613
    %v2664 = vadd.f32 %v2596, %v2613
    %v2665 = vadd.f32 %v2597, %v2613
    %v2666 = vadd.f32 %v2598, %v2613
    %v2667 = vadd.f32 %v2599, %v2613
    %v2668 = vadd.f32 %v2600, %v2613
    %v2669 = vadd.f32 %v2601, %v2613
    %v2670 = vadd.f32 %v2602, %v2613
    %v2671 = vadd.f32 %v2603, %v2613
    %v2672 = vadd.f32 %v2604, %v2613
    %v2673 = vadd.f32 %v2605, %v2613
    %v2674 = vadd.f32 %v2606, %v2613
    %v2675 = vadd.f32 %v2607, %v2613
    %v2676 = vadd.f32 %v2608, %v2613
    %v2677 = vadd.f32 %v2609, %v2613
    %v2678 = vadd.f32 %v2610, %v2613
    %v2679 = vmax.f32 %v2615, 0.0
    %v2680 = vmax.f32 %v2616, 0.0
    %v2681 = vmax.f32 %v2617, 0.0
    %v2682 = vmax.f32 %v2618, 0.0
    %v2683 = vmax.f32 %v2619, 0.0
    %v2684 = vmax.f32 %v2620, 0.0
    %v2685 = vmax.f32 %v2621, 0.0
    %v2686 = vmax.f32 %v2622, 0.0
    %v2687 = vmax.f32 %v2623, 0.0
    %v2688 = vmax.f32 %v2624, 0.0
    %v2689 = vmax.f32 %v2625, 0.0
    %v2690 = vmax.f32 %v2626, 0.0
    %v2691 = vmax.f32 %v2627, 0.0
    %v2692 = vmax.f32 %v2628, 0.0
    %v2693 = vmax.f32 %v2629, 0.0
    %v2694 = vmax.f32 %v2630, 0.0
    %v2695 = vmax.f32 %v2631, 0.0
    %v2696 = vmax.f32 %v2632, 0.0
    %v2697 = vmax.f32 %v2633, 0.0
    %v2698 = vmax.f32 %v2634, 0.0
    %v2699 = vmax.f32 %v2635, 0.0
    %v2700 = vmax.f32 %v2636, 0.0
    %v2701 = vmax.f32 %v2637, 0.0
    %v2702 = vmax.f32 %v2638, 0.0
    %v2703 = vmax.f32 %v2639, 0.0
    %v2704 = vmax.f32 %v2640, 0.0
    %v2705 = vmax.f32 %v2641, 0.0
    %v2706 = vmax.f32 %v2642, 0.0
    %v2707 = vmax.f32 %v2643, 0.0
    %v2708 = vmax.f32 %v2644, 0.0
    %v2709 = vmax.f32 %v2645, 0.0
    %v2710 = vmax.f32 %v2646, 0.0
    %v2711 = vmax.f32 %v2647, 0.0
    %v2712 = vmax.f32 %v2648, 0.0
    %v2713 = vmax.f32 %v2649, 0.0
    %v2714 = vmax.f32 %v2650, 0.0
    %v2715 = vmax.f32 %v2651, 0.0
    %v2716 = vmax.f32 %v2652, 0.0
    %v2717 = vmax.f32 %v2653, 0.0
    %v2718 = vmax.f32 %v2654, 0.0
    %v2719 = vmax.f32 %v2655, 0.0
    %v2720 = vmax.f32 %v2656, 0.0
    %v2721 = vmax.f32 %v2657, 0.0
    %v2722 = vmax.f32 %v2658, 0.0
    %v2723 = vmax.f32 %v2659, 0.0
    %v2724 = vmax.f32 %v2660, 0.0
    %v2725 = vmax.f32 %v2661, 0.0
    %v2726 = vmax.f32 %v2662, 0.0
    %v2727 = vmax.f32 %v2663, 0.0
    %v2728 = vmax.f32 %v2664, 0.0
    %v2729 = vmax.f32 %v2665, 0.0
    %v2730 = vmax.f32 %v2666, 0.0
    %v2731 = vmax.f32 %v2667, 0.0
    %v2732 = vmax.f32 %v2668, 0.0
    %v2733 = vmax.f32 %v2669, 0.0
    %v2734 = vmax.f32 %v2670, 0.0
    %v2735 = vmax.f32 %v2671, 0.0
    %v2736 = vmax.f32 %v2672, 0.0
    %v2737 = vmax.f32 %v2673, 0.0
    %v2738 = vmax.f32 %v2674, 0.0
    %v2739 = vmax.f32 %v2675, 0.0
    %v2740 = vmax.f32 %v2676, 0.0
    %v2741 = vmax.f32 %v2677, 0.0
    %v2742 = vmax.f32 %v2678, 0.0
    %2743 = vst [vmem:[#allocation2] sm:$0xff] %v2679
    %2744 = vst [vmem:[#allocation2 + $0x8] sm:$0xff] %v2680
    %2745 = vst [vmem:[#allocation2 + $0x10] sm:$0xff] %v2681
    %2746 = vst [vmem:[#allocation2 + $0x18] sm:$0xff] %v2682
    %2747 = vst [vmem:[#allocation2 + $0x20] sm:$0xff] %v2683
    %2748 = vst [vmem:[#allocation2 + $0x28] sm:$0xff] %v2684
    %2749 = vst [vmem:[#allocation2 + $0x30] sm:$0xff] %v2685
    %2750 = vst [vmem:[#allocation2 + $0x38] sm:$0xff] %v2686
    %2751 = vst [vmem:[#allocation2 + $0x40] sm:$0xff] %v2687
    %2752 = vst [vmem:[#allocation2 + $0x48] sm:$0xff] %v2688
    %2753 = vst [vmem:[#allocation2 + $0x50] sm:$0xff] %v2689
    %2754 = vst [vmem:[#allocation2 + $0x58] sm:$0xff] %v2690
    %2755 = vst [vmem:[#allocation2 + $0x60] sm:$0xff] %v2691
    %2756 = vst [vmem:[#allocation2 + $0x68] sm:$0xff] %v2692
    %2757 = vst [vmem:[#allocation2 + $0x70] sm:$0xff] %v2693
    %2758 = vst [vmem:[#allocation2 + $0x78] sm:$0xff] %v2694
    %2759 = vst [vmem:[#allocation2 + $0x80] sm:$0xff] %v2695
    %2760 = vst [vmem:[#allocation2 + $0x88] sm:$0xff] %v2696
    %2761 = vst [vmem:[#allocation2 + $0x90] sm:$0xff] %v2697
    %2762 = vst [vmem:[#allocation2 + $0x98] sm:$0xff] %v2698
    %2763 = vst [vmem:[#allocation2 + $0xa0] sm:$0xff] %v2699
    %2764 = vst [vmem:[#allocation2 + $0xa8] sm:$0xff] %v2700
    %2765 = vst [vmem:[#allocation2 + $0xb0] sm:$0xff] %v2701
    %2766 = vst [vmem:[#allocation2 + $0xb8] sm:$0xff] %v2702
    %2767 = vst [vmem:[#allocation2 + $0xc0] sm:$0xff] %v2703
    %2768 = vst [vmem:[#allocation2 + $0xc8] sm:$0xff] %v2704
    %2769 = vst [vmem:[#allocation2 + $0xd0] sm:$0xff] %v2705
    %2770 = vst [vmem:[#allocation2 + $0xd8] sm:$0xff] %v2706
    %2771 = vst [vmem:[#allocation2 + $0xe0] sm:$0xff] %v2707
    %2772 = vst [vmem:[#allocation2 + $0xe8] sm:$0xff] %v2708
    %2773 = vst [vmem:[#allocation2 + $0xf0] sm:$0xff] %v2709
    %2774 = vst [vmem:[#allocation2 + $0xf8] sm:$0xff] %v2710
    %2775 = vst [vmem:[#allocation2 + $0x100] sm:$0xff] %v2711
    %2776 = vst [vmem:[#allocation2 + $0x108] sm:$0xff] %v2712
    %2777 = vst [vmem:[#allocation2 + $0x110] sm:$0xff] %v2713
    %2778 = vst [vmem:[#allocation2 + $0x118] sm:$0xff] %v2714
    %2779 = vst [vmem:[#allocation2 + $0x120] sm:$0xff] %v2715
    %2780 = vst [vmem:[#allocation2 + $0x128] sm:$0xff] %v2716
    %2781 = vst [vmem:[#allocation2 + $0x130] sm:$0xff] %v2717
    %2782 = vst [vmem:[#allocation2 + $0x138] sm:$0xff] %v2718
    %2783 = vst [vmem:[#allocation2 + $0x140] sm:$0xff] %v2719
    %2784 = vst [vmem:[#allocation2 + $0x148] sm:$0xff] %v2720
    %2785 = vst [vmem:[#allocation2 + $0x150] sm:$0xff] %v2721
    %2786 = vst [vmem:[#allocation2 + $0x158] sm:$0xff] %v2722
    %2787 = vst [vmem:[#allocation2 + $0x160] sm:$0xff] %v2723
    %2788 = vst [vmem:[#allocation2 + $0x168] sm:$0xff] %v2724
    %2789 = vst [vmem:[#allocation2 + $0x170] sm:$0xff] %v2725
    %2790 = vst [vmem:[#allocation2 + $0x178] sm:$0xff] %v2726
    %2791 = vst [vmem:[#allocation2 + $0x180] sm:$0xff] %v2727
    %2792 = vst [vmem:[#allocation2 + $0x188] sm:$0xff] %v2728
    %2793 = vst [vmem:[#allocation2 + $0x190] sm:$0xff] %v2729
    %2794 = vst [vmem:[#allocation2 + $0x198] sm:$0xff] %v2730
    %2795 = vst [vmem:[#allocation2 + $0x1a0] sm:$0xff] %v2731
    %2796 = vst [vmem:[#allocation2 + $0x1a8] sm:$0xff] %v2732
    %2797 = vst [vmem:[#allocation2 + $0x1b0] sm:$0xff] %v2733
    %2798 = vst [vmem:[#allocation2 + $0x1b8] sm:$0xff] %v2734
    %2799 = vst [vmem:[#allocation2 + $0x1c0] sm:$0xff] %v2735
    %2800 = vst [vmem:[#allocation2 + $0x1c8] sm:$0xff] %v2736
    %2801 = vst [vmem:[#allocation2 + $0x1d0] sm:$0xff] %v2737
    %2802 = vst [vmem:[#allocation2 + $0x1d8] sm:$0xff] %v2738
    %2803 = vst [vmem:[#allocation2 + $0x1e0] sm:$0xff] %v2739
    %2804 = vst [vmem:[#allocation2 + $0x1e8] sm:$0xff] %v2740
    %2805 = vst [vmem:[#allocation2 + $0x1f0] sm:$0xff] %v2741
    %2806 = vst [vmem:[#allocation2 + $0x1f8] sm:$0xff] %v2742
    // Predicated region
    $region18: #{tpu_custom_call.1} parent=1 // pred_check
      _
    $region19: #{tpu_custom_call.1} parent=1 // pred_check_branch
      %2808 = sbr.rel (0) target = $region21
    $region20: #{tpu_custom_call.1} parent=1 // pred_region
      %2810 = vsyncadd [#allocation3], 0
      %s2811 = sshll.u32 [#allocation2], 4
      %s2812 = int_to_ptr.vmem [resolvable:$true] %s2811
      %s2813 = sshll.u32 %s4, 4
      %s2814 = int_to_ptr.hbm [resolvable:$true] %s2813
      %2819 = dma.vmem_to_hbm [thread:$0]  %s2812, 8192, %s2814, [#allocation3], 128, 128, 8
    $region21: #{tpu_custom_call.1} parent=1 // pred_fallthru
      _
    // Predicated region
    $region22: #{tpu_custom_call.1} parent=1 // pred_check
      _
    $region23: #{tpu_custom_call.1} parent=1 // pred_check_branch
      %2821 = sbr.rel (0) target = $region25
    $region24: #{tpu_custom_call.1} parent=1 // pred_region
      %2823 = dma.done [#allocation3], 8192
    $region25: #{tpu_custom_call.1} parent=1 // pred_fallthru
      _
    %2824 = vsyncpa [#allocation3], 1

</llo_original>
